<compile_context>
chip_gen: v7x
topology: tpu7x:2x2x1
jax: 0.10.0
libtpu: 0.0.40
codegen_flags: <defaults>
</compile_context>

<pallas_src>
import functools

import jax
import jax.numpy as jnp
from jax import lax
from jax.experimental import pallas as pl
from jax.experimental.pallas import tpu as pltpu


# ----------------------------------------------------------------------------
# Kernels
# ----------------------------------------------------------------------------
def _conv_block_kernel_banded(x_ref, a1_ref, b1_ref, a2_ref, b2_ref, o_ref, *,
                              H, rblk):
    """Small-channel path: W is folded into the lane dimension.

    x_ref : (bblk, rblk+4, Wp*Cin)  bf16, 2-row H halo + 1-col W halo, zeros.
    a1_ref: (3, Wp*Cin, Wp*Cout)    banded conv1 weights (bf16).
    b1_ref: (1, Wp*Cout)            f32 bias, zero at the W-halo positions.
    a2_ref: (3, Wp*Cout, W*Cout)    banded conv2 weights (bf16).
    b2_ref: (1, W*Cout)             f32 bias.
    o_ref : (bblk, rblk, W*Cout)    lane-dense output.
    """
    bblk = x_ref.shape[0]
    rows_mid = rblk + 2
    n_mid = a1_ref.shape[-1]

    def band_conv(src, a_ref, nrows):
        k = src.shape[-1]
        acc = jnp.zeros((bblk * nrows, a_ref.shape[-1]), jnp.float32)
        for dy in range(3):
            lhs = src[:, dy:dy + nrows, :].reshape(bblk * nrows, k)
            acc = acc + jnp.dot(lhs, a_ref[dy],
                                preferred_element_type=jnp.float32)
        return acc

    x = x_ref[...]
    h = jnp.maximum(band_conv(x, a1_ref, rows_mid) + b1_ref[...], 0.0)
    h = h.reshape(bblk, rows_mid, n_mid)

    # Zero the ReLU(conv1) rows that fall outside the image: they are the
    # "SAME" zero-padding rows seen by conv2 (only the first / last row block
    # has any).  The W-halo columns are already zero (zero weight columns +
    # zero bias -> relu(0) = 0).
    r0 = pl.program_id(1) * rblk
    m = lax.broadcasted_iota(jnp.int32, (rows_mid, 1), 0)
    g = r0 - 1 + m
    valid = jnp.logical_and(g >= 0, g < H)
    h = jnp.where(valid, h, 0.0).astype(jnp.bfloat16)

    out = jnp.maximum(band_conv(h, a2_ref, rblk) + b2_ref[...], 0.0)
    # Dropout2d(p=0.3) is identity in eval mode.
    o_ref[...] = out.reshape(o_ref.shape).astype(o_ref.dtype)


def _conv_block_kernel_general(x_ref, w1_ref, b1_ref, w2_ref, b2_ref, o_ref,
                               mid_ref, *, H, rblk, fused1, fused2):
    """General path: channel-minor im2col matmuls.

    x_ref  : (bblk, rblk+4, Wp, Cin) bf16 slab (2-row H halo, 1-col W halo).
    w1_ref : (9, Cin, Cout) bf16, or (9*Cin, Cout) when fused1.
    w2_ref : (9, Cout, Cout) bf16, or (9*Cout, Cout) when fused2.
    b*_ref : (1, Cout) f32.
    o_ref  : (bblk, rblk, W, Cout).
    mid_ref: (bblk, rblk+2, Wp, Cout) bf16 scratch (padded ReLU(conv1)).
    """
    bblk, _, Wp, Cin = x_ref.shape
    W = Wp - 2
    Cout = mid_ref.shape[-1]
    rows_mid = rblk + 2

    def conv3x3(tap, w_ref, cin, nrows, fused):
        m = bblk * nrows * W
        if fused:
            # Single MXU matmul with K = 9*cin (only used when cin % 128 == 0,
            # so the 9-way lane concat is tile-aligned).
            cols = jnp.concatenate([tap(t) for t in range(9)], axis=-1)
            return jnp.dot(cols.reshape(m, 9 * cin), w_ref[...],
                           preferred_element_type=jnp.float32)
        acc = jnp.zeros((m, w_ref.shape[-1]), jnp.float32)
        for t in range(9):
            acc = acc + jnp.dot(tap(t).reshape(m, cin), w_ref[t],
                                preferred_element_type=jnp.float32)
        return acc

    def x_tap(t):
        dy, dx = divmod(t, 3)
        return x_ref[:, dy:dy + rows_mid, dx:dx + W, :]

    h = jnp.maximum(conv3x3(x_tap, w1_ref, Cin, rows_mid, fused1)
                    + b1_ref[...], 0.0)
    h = h.reshape(bblk, rows_mid, W, Cout)

    # Mask the intermediate rows that lie outside the image (conv2 "SAME" pad).
    r0 = pl.program_id(1) * rblk
    m_idx = lax.broadcasted_iota(jnp.int32, (rows_mid, 1, 1), 0)
    g = r0 - 1 + m_idx
    valid = jnp.logical_and(g >= 0, g < H)
    h = jnp.where(valid, h, 0.0).astype(jnp.bfloat16)

    # Stage the padded-width intermediate.  Only the 1-pixel W-halo columns are
    # (re)zeroed each step; the interior is fully overwritten.  Re-zeroing every
    # step keeps each TensorCore's private scratch self-contained under the
    # "parallel" grid semantics.
    zcol = jnp.zeros((bblk, rows_mid, 1, Cout), jnp.bfloat16)
    mid_ref[:, :, 0:1, :] = zcol
    mid_ref[:, :, Wp - 1:Wp, :] = zcol
    mid_ref[:, :, 1:W + 1, :] = h

    def m_tap(t):
        dy, dx = divmod(t, 3)
        return mid_ref[:, dy:dy + rblk, dx:dx + W, :]

    out = jnp.maximum(conv3x3(m_tap, w2_ref, Cout, rblk, fused2)
                      + b2_ref[...], 0.0)
    # Dropout2d(p=0.3) is identity in eval mode.
    o_ref[...] = out.reshape(o_ref.shape).astype(o_ref.dtype)


# ----------------------------------------------------------------------------
# Static configuration helpers (all plain Python on shapes / hardware info)
# ----------------------------------------------------------------------------
def _round_up(a, b):
    return -(-a // b) * b


def _divisors(n):
    return [d for d in range(1, n + 1) if n % d == 0]


def _vmem_limit_bytes():
    cap = 64 << 20
    try:
        info = pltpu.get_tpu_info()
        cap = int(getattr(info, "vmem_capacity_bytes", cap)) or cap
    except Exception:
        pass
    # 96 MiB on 128 MiB parts (v5e/v6e), 48 MiB on 64 MiB parts (v7x).
    return max(32 << 20, min(cap * 3 // 4, cap - (16 << 20)))


def _num_tensorcores():
    try:
        info = pltpu.get_tpu_info()
        for name in ("num_cores", "tensor_cores", "num_tensorcores",
                     "cores_per_chip"):
            v = getattr(info, name, None)
            if isinstance(v, int) and v > 0:
                return v
    except Exception:
        pass
    try:
        return int(getattr(jax.devices()[0], "num_cores", 1) or 1)
    except Exception:
        return 1


def _use_banded(Cin, Cout, W):
    """Small-channel, small-width layers use the lane-dense banded formulation."""
    if Cin > 32 or Cout > 32:
        return False
    Wp = W + 2
    banded_bytes = (3 * (Wp * Cin) * (Wp * Cout) + 3 * (Wp * Cout) * (W * Cout)) * 2
    return banded_bytes <= (4 << 20)


def _pick_blocks(N, H, W, Cin, Cout, banded, vmem_limit, num_tc):
    """Choose (batch block, row block) from a per-step VMEM estimate."""
    Wp = W + 2
    rcands = sorted({d for d in _divisors(H) if d % 8 == 0} | {H})
    bcands = _divisors(N)
    budget = int(vmem_limit * 0.6)          # headroom for Mosaic temporaries
    target_px = 8192 if vmem_limit >= (80 << 20) else 2048

    def bytes_per_step(bblk, rblk):
        ri, rm = rblk + 4, rblk + 2
        if banded:
            l_in = _round_up(Wp * Cin, 128)
            l_mid = _round_up(Wp * Cout, 128)
            l_out = _round_up(W * Cout, 128)
            xin = bblk * _round_up(ri, 8) * l_in * 2
            mid = bblk * _round_up(rm, 8) * l_mid * 6
            out = bblk * _round_up(rblk, 8) * l_out * 4
            wts = 3 * (_round_up(Wp * Cin, 8) * l_mid
                       + _round_up(Wp * Cout, 8) * l_out) * 2
        else:
            lc_i = _round_up(Cin, 128)
            lc_o = _round_up(Cout, 128)
            xin = bblk * ri * _round_up(Wp, 8) * lc_i * 2
            mid = (bblk * rm * _round_up(Wp, 8) * lc_o * 2
                   + bblk * rm * W * lc_o * 4)
            out = bblk * rblk * _round_up(W, 8) * lc_o * 4
            wts = 9 * (_round_up(Cin, 8) + _round_up(Cout, 8)) * lc_o * 2
        return 2 * (xin + out + wts) + mid

    feas = [(b, r) for b in bcands for r in rcands
            if bytes_per_step(b, r) <= budget]
    if not feas:
        feas = [(1, min(rcands))]

    def px(c):
        return c[0] * c[1] * W

    under = [c for c in feas if px(c) <= target_px]
    pick = max(under, key=px) if under else min(feas, key=px)

    # Prefer >=2 grid steps only on multi-TensorCore parts (v7x); on single-TC
    # chips the grid is a sequential loop and splitting only adds overhead.
    if num_tc >= 2 and (N // pick[0]) * (H // pick[1]) < 2:
        multi = [c for c in feas if (N // c[0]) * (H // c[1]) >= 2]
        if multi:
            pick = max(multi, key=px)
    return pick


# ----------------------------------------------------------------------------
# Weight packing (wrapper glue)
# ----------------------------------------------------------------------------
def _pack_tap_weights(w_oihw, fused):
    Cout, Cin = w_oihw.shape[0], w_oihw.shape[1]
    w = jnp.transpose(w_oihw, (2, 3, 1, 0)).reshape(9, Cin, Cout)
    if fused:
        w = w.reshape(9 * Cin, Cout)
    return w.astype(jnp.bfloat16)


def _banded_weights(w_oihw, W, *, pad_out):
    """Banded conv weights: A[dy][(x+dx)*Cin+ci, xo*Cout+co] = w[co,ci,dy,dx]."""
    Cout, Cin = w_oihw.shape[0], w_oihw.shape[1]
    Wp = W + 2
    w = jnp.transpose(w_oihw, (2, 3, 1, 0)).astype(jnp.float32)  # (ky,kx,Ci,Co)
    xi = jnp.arange(Wp)[:, None]
    xo = jnp.arange(W)[None, :]
    mats = []
    for dy in range(3):
        acc = 0.0
        for dx in range(3):
            s = (xi == xo + dx).astype(jnp.float32)              # (Wp, W)
            if pad_out:
                s = jnp.pad(s, ((0, 0), (1, 1)))                 # (Wp, Wp)
            acc = acc + jnp.einsum("po,cd->pcod", s, w[dy, dx])
        wo = Wp if pad_out else W
        mats.append(acc.reshape(Wp * Cin, wo * Cout))
    return jnp.stack(mats, axis=0).astype(jnp.bfloat16)


# ----------------------------------------------------------------------------
# Forward implementation
# ----------------------------------------------------------------------------
@functools.partial(
    jax.jit,
    static_argnames=("bblk", "rblk", "banded", "fused1", "fused2",
                     "vmem_limit", "out_dtype"))
def _conv_block_impl(x_nchw, w1_oihw, b1, w2_oihw, b2, *, bblk, rblk, banded,
                     fused1, fused2, vmem_limit, out_dtype):
    N, Cin, H, W = x_nchw.shape
    Cout = w1_oihw.shape[0]
    Wp = W + 2
    nb, nr = N // bblk, H // rblk
    rows_in, rows_mid = rblk + 4, rblk + 2

    # Layout glue: NCHW -> NHWC, 2-row / 1-col zero halo, bf16 cast, and
    # halo'd row slabs (each slab carries its own conv halo so BlockSpec
    # auto-pipelining works with a pure row-block grid).
    x_nhwc = jnp.transpose(x_nchw, (0, 2, 3, 1))
    xp = jnp.pad(x_nhwc, ((0, 0), (2, 2), (1, 1), (0, 0)))
    slabs = jnp.stack([xp[:, r * rblk:r * rblk + rows_in] for r in range(nr)],
                      axis=0)                                     # (nr,N,ri,Wp,C)
    slabs = slabs.reshape(nr * N, rows_in, Wp, Cin).astype(jnp.bfloat16)

    cp = pltpu.CompilerParams(
        dimension_semantics=("parallel", "parallel"),
        vmem_limit_bytes=vmem_limit,
    )
    grid = (nb, nr)

    if banded:
        x_in = slabs.reshape(nr * N, rows_in, Wp * Cin)           # lane-dense
        a1 = _banded_weights(w1_oihw, W, pad_out=True)            # (3,WpCi,WpCo)
        a2 = _banded_weights(w2_oihw, W, pad_out=False)           # (3,WpCo,WCo)
        wmask = ((jnp.arange(Wp) >= 1) & (jnp.arange(Wp) <= W)).astype(jnp.float32)
        b1r = (wmask[:, None] * b1.astype(jnp.float32)[None, :]).reshape(1, Wp * Cout)
        b2r = jnp.tile(b2.astype(jnp.float32), W).reshape(1, W * Cout)

        kernel = functools.partial(_conv_block_kernel_banded, H=H, rblk=rblk)
        out = pl.pallas_call(
            kernel,
            out_shape=jax.ShapeDtypeStruct((N, H, W * Cout), out_dtype),
            grid_spec=pltpu.PrefetchScalarGridSpec(
                num_scalar_prefetch=0,
                grid=grid,
                in_specs=[
                    pl.BlockSpec((bblk, rows_in, Wp * Cin),
                                 lambda b, r: (r * nb + b, 0, 0)),
                    pl.BlockSpec((3, Wp * Cin, Wp * Cout), lambda b, r: (0, 0, 0)),
                    pl.BlockSpec((1, Wp * Cout), lambda b, r: (0, 0)),
                    pl.BlockSpec((3, Wp * Cout, W * Cout), lambda b, r: (0, 0, 0)),
                    pl.BlockSpec((1, W * Cout), lambda b, r: (0, 0)),
                ],
                out_specs=pl.BlockSpec((bblk, rblk, W * Cout),
                                       lambda b, r: (b, r, 0)),
            ),
            compiler_params=cp,
        )(x_in, a1, b1r, a2, b2r)
        out = out.reshape(N, H, W, Cout)   # byte-preserving; undoes lane folding
    else:
        w1p = _pack_tap_weights(w1_oihw, fused1)
        w2p = _pack_tap_weights(w2_oihw, fused2)
        b1p = b1.reshape(1, Cout).astype(jnp.float32)
        b2p = b2.reshape(1, Cout).astype(jnp.float32)
        nd1, nd2 = w1p.ndim, w2p.ndim

        kernel = functools.partial(_conv_block_kernel_general, H=H, rblk=rblk,
                                   fused1=fused1, fused2=fused2)
        out = pl.pallas_call(
            kernel,
            out_shape=jax.ShapeDtypeStruct((N, H, W, Cout), out_dtype),
            grid_spec=pltpu.PrefetchScalarGridSpec(
                num_scalar_prefetch=0,
                grid=grid,
                in_specs=[
                    pl.BlockSpec((bblk, rows_in, Wp, Cin),
                                 lambda b, r: (r * nb + b, 0, 0, 0)),
                    pl.BlockSpec(w1p.shape, lambda b, r: (0,) * nd1),
                    pl.BlockSpec((1, Cout), lambda b, r: (0, 0)),
                    pl.BlockSpec(w2p.shape, lambda b, r: (0,) * nd2),
                    pl.BlockSpec((1, Cout), lambda b, r: (0, 0)),
                ],
                out_specs=pl.BlockSpec((bblk, rblk, W, Cout),
                                       lambda b, r: (b, r, 0, 0)),
                scratch_shapes=[
                    pltpu.VMEM((bblk, rows_mid, Wp, Cout), jnp.bfloat16)],
            ),
            compiler_params=cp,
        )(slabs, w1p, b1p, w2p, b2p)

    return jnp.transpose(out, (0, 3, 1, 2)).astype(out_dtype)


def conv_block_forward(x_nchw, w1_oihw, b1, w2_oihw, b2, *,
                       out_dtype=jnp.float32):
    """Eval-mode ConvBlock: (N, Cin, H, W) f32 -> (N, Cout, H, W).

    Matmul operands are bf16 (native MXU path) with f32 accumulation; the
    ReLU(conv1) intermediate is also staged in bf16.  Set out_dtype=jnp.bfloat16
    when chaining into another bf16 consumer to halve the output HBM traffic.
    """
    N, Cin, H, W = x_nchw.shape
    Cout = w1_oihw.shape[0]
    banded = _use_banded(Cin, Cout, W)
    fused1 = (not banded) and (Cin % 128 == 0)
    fused2 = (not banded) and (Cout % 128 == 0)
    vmem_limit = _vmem_limit_bytes()
    num_tc = _num_tensorcores()
    bblk, rblk = _pick_blocks(N, H, W, Cin, Cout, banded, vmem_limit, num_tc)
    return _conv_block_impl(x_nchw, w1_oihw, b1, w2_oihw, b2,
                            bblk=bblk, rblk=rblk, banded=banded,
                            fused1=fused1, fused2=fused2,
                            vmem_limit=vmem_limit, out_dtype=out_dtype)


# ----------------------------------------------------------------------------
# Pure-JAX reference (matches the kernel's bf16 operand / intermediate numerics)
# ----------------------------------------------------------------------------
def _reference_forward(x_nchw, w1_oihw, b1, w2_oihw, b2, *, bf16_operands=True):
    f32 = jnp.float32
    if bf16_operands:
        q = lambda a: a.astype(jnp.bfloat16).astype(f32)
    else:
        q = lambda a: a.astype(f32)
    x = jnp.transpose(q(x_nchw), (0, 2, 3, 1))
    k1 = jnp.transpose(q(w1_oihw), (2, 3, 1, 0))
    k2 = jnp.transpose(q(w2_oihw), (2, 3, 1, 0))
    dn = ("NHWC", "HWIO", "NHWC")
    h = lax.conv_general_dilated(x, k1, (1, 1), "SAME", dimension_numbers=dn,
                                 precision=lax.Precision.HIGHEST) + b1.astype(f32)
    h = jnp.maximum(h, 0.0)
    if bf16_operands:
        h = q(h)   # kernel stages ReLU(conv1) in bf16
    o = lax.conv_general_dilated(h, k2, (1, 1), "SAME", dimension_numbers=dn,
                                 precision=lax.Precision.HIGHEST) + b2.astype(f32)
    o = jnp.maximum(o, 0.0)
    return jnp.transpose(o, (0, 3, 1, 2))


# ----------------------------------------------------------------------------
# Tests: one case per code path (banded, 9-matmul, fused 128-aligned).
# ----------------------------------------------------------------------------
def _run_case(name, N, Cin, Cout, H, W, key):
    kx, k1, kb1, k2, kb2 = jax.random.split(key, 5)
    x = jax.random.normal(kx, (N, Cin, H, W), jnp.float32)
    w1 = jax.random.normal(k1, (Cout, Cin, 3, 3), jnp.float32) * 0.1
    b1 = jax.random.normal(kb1, (Cout,), jnp.float32) * 0.1
    w2 = jax.random.normal(k2, (Cout, Cout, 3, 3), jnp.float32) * 0.1
    b2 = jax.random.normal(kb2, (Cout,), jnp.float32) * 0.1

    out = jax.block_until_ready(conv_block_forward(x, w1, b1, w2, b2))
    assert out.shape == (N, Cout, H, W), f"{name}: bad shape {out.shape}"

    ref = _reference_forward(x, w1, b1, w2, b2, bf16_operands=True)
    err = float(jnp.max(jnp.abs(out - ref)))
    assert jnp.allclose(out, ref, atol=2e-2, rtol=2e-2), f"{name}: max_err={err}"


if __name__ == "__main__":
    key = jax.random.PRNGKey(0)
    k1, k2, k3 = jax.random.split(key, 3)
    # Small-channel (banded, lane-dense) path — module-consistent small shapes.
    _run_case("small_c_banded", N=2, Cin=4, Cout=8, H=16, W=16, key=k1)
    # Mid-channel path: channel-minor, 9 accumulating matmuls.
    _run_case("general_9tap", N=2, Cin=64, Cout=64, H=16, W=16, key=k2)
    # 128-aligned channels: fused single-matmul im2col per conv.
    _run_case("general_fused", N=1, Cin=128, Cout=128, H=8, W=8, key=k3)
    print("KERNEL_OK")
</pallas_src>

<mosaic_0001>
module attributes {stable_mosaic.version = 11 : i64} {
  func.func @_conv_block_kernel_banded(%arg0: i32, %arg1: i32, %arg2: memref<2x20x72xbf16, #tpu.memory_space<vmem>>, %arg3: memref<3x72x144xbf16, #tpu.memory_space<vmem>>, %arg4: memref<1x144xf32, #tpu.memory_space<vmem>>, %arg5: memref<3x144x128xbf16, #tpu.memory_space<vmem>>, %arg6: memref<1x128xf32, #tpu.memory_space<vmem>>, %arg7: memref<2x16x128xf32, #tpu.memory_space<vmem>>) attributes {dimension_semantics = [#tpu.dimension_semantics<parallel>, #tpu.dimension_semantics<parallel>], iteration_bounds = array<i64: 1, 1>, scalar_prefetch = 0 : i64, scratch_operands = 0 : i64, tpu.core_type = #tpu.core_type<tc>, window_params = [{transform_indices = @transform_0, window_bounds = array<i64: 2, 20, 72>}, {pipeline_mode = #tpu.pipeline_mode<synchronous>, transform_indices = @transform_1, window_bounds = array<i64: 3, 72, 144>}, {pipeline_mode = #tpu.pipeline_mode<synchronous>, transform_indices = @transform_2, window_bounds = array<i64: 1, 144>}, {pipeline_mode = #tpu.pipeline_mode<synchronous>, transform_indices = @transform_3, window_bounds = array<i64: 3, 144, 128>}, {pipeline_mode = #tpu.pipeline_mode<synchronous>, transform_indices = @transform_4, window_bounds = array<i64: 1, 128>}, {transform_indices = @transform_5, window_bounds = array<i64: 2, 16, 128>}]} {
    %c0 = arith.constant 0 : index
    %c0_0 = arith.constant 0 : index
    %c0_1 = arith.constant 0 : index
    %0 = vector.load %arg2[%c0, %c0_0, %c0_1] : memref<2x20x72xbf16, #tpu.memory_space<vmem>>, vector<2x20x72xbf16>
    %cst = arith.constant 0.000000e+00 : f32
    %1 = vector.broadcast %cst : f32 to vector<36x144xf32>
    %2 = vector.extract_strided_slice %0 {offsets = [0, 0, 0], sizes = [2, 18, 72], strides = [1, 1, 1]} : vector<2x20x72xbf16> to vector<2x18x72xbf16>
    %3 = vector.shape_cast %2 : vector<2x18x72xbf16> to vector<36x72xbf16>
    %c0_2 = arith.constant 0 : index
    %c0_3 = arith.constant 0 : index
    %c0_4 = arith.constant 0 : index
    %4 = vector.load %arg3[%c0_2, %c0_3, %c0_4] : memref<3x72x144xbf16, #tpu.memory_space<vmem>>, vector<1x72x144xbf16>
    %5 = vector.shape_cast %4 : vector<1x72x144xbf16> to vector<72x144xbf16>
    %cst_5 = arith.constant dense<0.000000e+00> : vector<36x144xf32>
    %6 = tpu.matmul %3, %5, %cst_5 {dimension_numbers = #tpu.dot_dimension_numbers<[1], [0], [0], [1], [0, 0, 1, 1], [], []>} : vector<36x72xbf16>, vector<72x144xbf16>, vector<36x144xf32> -> vector<36x144xf32>
    %7 = arith.addf %1, %6 : vector<36x144xf32>
    %8 = vector.extract_strided_slice %0 {offsets = [0, 1, 0], sizes = [2, 18, 72], strides = [1, 1, 1]} : vector<2x20x72xbf16> to vector<2x18x72xbf16>
    %9 = vector.shape_cast %8 : vector<2x18x72xbf16> to vector<36x72xbf16>
    %c1 = arith.constant 1 : index
    %c0_6 = arith.constant 0 : index
    %c0_7 = arith.constant 0 : index
    %10 = vector.load %arg3[%c1, %c0_6, %c0_7] : memref<3x72x144xbf16, #tpu.memory_space<vmem>>, vector<1x72x144xbf16>
    %11 = vector.shape_cast %10 : vector<1x72x144xbf16> to vector<72x144xbf16>
    %cst_8 = arith.constant dense<0.000000e+00> : vector<36x144xf32>
    %12 = tpu.matmul %9, %11, %cst_8 {dimension_numbers = #tpu.dot_dimension_numbers<[1], [0], [0], [1], [0, 0, 1, 1], [], []>} : vector<36x72xbf16>, vector<72x144xbf16>, vector<36x144xf32> -> vector<36x144xf32>
    %13 = arith.addf %7, %12 : vector<36x144xf32>
    %14 = vector.extract_strided_slice %0 {offsets = [0, 2, 0], sizes = [2, 18, 72], strides = [1, 1, 1]} : vector<2x20x72xbf16> to vector<2x18x72xbf16>
    %15 = vector.shape_cast %14 : vector<2x18x72xbf16> to vector<36x72xbf16>
    %c2 = arith.constant 2 : index
    %c0_9 = arith.constant 0 : index
    %c0_10 = arith.constant 0 : index
    %16 = vector.load %arg3[%c2, %c0_9, %c0_10] : memref<3x72x144xbf16, #tpu.memory_space<vmem>>, vector<1x72x144xbf16>
    %17 = vector.shape_cast %16 : vector<1x72x144xbf16> to vector<72x144xbf16>
    %cst_11 = arith.constant dense<0.000000e+00> : vector<36x144xf32>
    %18 = tpu.matmul %15, %17, %cst_11 {dimension_numbers = #tpu.dot_dimension_numbers<[1], [0], [0], [1], [0, 0, 1, 1], [], []>} : vector<36x72xbf16>, vector<72x144xbf16>, vector<36x144xf32> -> vector<36x144xf32>
    %19 = arith.addf %13, %18 : vector<36x144xf32>
    %c0_12 = arith.constant 0 : index
    %c0_13 = arith.constant 0 : index
    %20 = vector.load %arg4[%c0_12, %c0_13] : memref<1x144xf32, #tpu.memory_space<vmem>>, vector<1x144xf32>
    %21 = vector.broadcast %20 : vector<1x144xf32> to vector<36x144xf32>
    %22 = arith.addf %19, %21 : vector<36x144xf32>
    %cst_14 = arith.constant 0.000000e+00 : f32
    %23 = vector.broadcast %cst_14 : f32 to vector<36x144xf32>
    %24 = arith.maximumf %22, %23 : vector<36x144xf32>
    %25 = vector.shape_cast %24 : vector<36x144xf32> to vector<2x18x144xf32>
    %c16_i32 = arith.constant 16 : i32
    %26 = arith.muli %arg1, %c16_i32 : i32
    %27 = tpu.iota {dimensions = array<i32: 0>} : vector<18x1xi32>
    %c1_i32 = arith.constant 1 : i32
    %28 = arith.subi %26, %c1_i32 : i32
    %29 = vector.broadcast %28 : i32 to vector<18x1xi32>
    %30 = arith.addi %29, %27 : vector<18x1xi32>
    %c0_i32 = arith.constant 0 : i32
    %31 = vector.broadcast %c0_i32 : i32 to vector<18x1xi32>
    %32 = arith.cmpi sge, %30, %31 : vector<18x1xi32>
    %c16_i32_15 = arith.constant 16 : i32
    %33 = vector.broadcast %c16_i32_15 : i32 to vector<18x1xi32>
    %34 = arith.cmpi slt, %30, %33 : vector<18x1xi32>
    %35 = arith.andi %32, %34 : vector<18x1xi1>
    %cst_16 = arith.constant 0.000000e+00 : f32
    %36 = vector.shape_cast %35 : vector<18x1xi1> to vector<1x18x1xi1>
    %37 = vector.broadcast %36 : vector<1x18x1xi1> to vector<2x18x144xi1>
    %38 = vector.broadcast %cst_16 : f32 to vector<2x18x144xf32>
    %39 = arith.select %37, %25, %38 : vector<2x18x144xi1>, vector<2x18x144xf32>
    %40 = arith.truncf %39 : vector<2x18x144xf32> to vector<2x18x144xbf16>
    %cst_17 = arith.constant 0.000000e+00 : f32
    %41 = vector.broadcast %cst_17 : f32 to vector<32x128xf32>
    %42 = vector.extract_strided_slice %40 {offsets = [0, 0, 0], sizes = [2, 16, 144], strides = [1, 1, 1]} : vector<2x18x144xbf16> to vector<2x16x144xbf16>
    %43 = vector.shape_cast %42 : vector<2x16x144xbf16> to vector<32x144xbf16>
    %c0_18 = arith.constant 0 : index
    %c0_19 = arith.constant 0 : index
    %c0_20 = arith.constant 0 : index
    %44 = vector.load %arg5[%c0_18, %c0_19, %c0_20] : memref<3x144x128xbf16, #tpu.memory_space<vmem>>, vector<1x144x128xbf16>
    %45 = vector.shape_cast %44 : vector<1x144x128xbf16> to vector<144x128xbf16>
    %cst_21 = arith.constant dense<0.000000e+00> : vector<32x128xf32>
    %46 = tpu.matmul %43, %45, %cst_21 {dimension_numbers = #tpu.dot_dimension_numbers<[1], [0], [0], [1], [0, 0, 1, 1], [], []>} : vector<32x144xbf16>, vector<144x128xbf16>, vector<32x128xf32> -> vector<32x128xf32>
    %47 = arith.addf %41, %46 : vector<32x128xf32>
    %48 = vector.extract_strided_slice %40 {offsets = [0, 1, 0], sizes = [2, 16, 144], strides = [1, 1, 1]} : vector<2x18x144xbf16> to vector<2x16x144xbf16>
    %49 = vector.shape_cast %48 : vector<2x16x144xbf16> to vector<32x144xbf16>
    %c1_22 = arith.constant 1 : index
    %c0_23 = arith.constant 0 : index
    %c0_24 = arith.constant 0 : index
    %50 = vector.load %arg5[%c1_22, %c0_23, %c0_24] : memref<3x144x128xbf16, #tpu.memory_space<vmem>>, vector<1x144x128xbf16>
    %51 = vector.shape_cast %50 : vector<1x144x128xbf16> to vector<144x128xbf16>
    %cst_25 = arith.constant dense<0.000000e+00> : vector<32x128xf32>
    %52 = tpu.matmul %49, %51, %cst_25 {dimension_numbers = #tpu.dot_dimension_numbers<[1], [0], [0], [1], [0, 0, 1, 1], [], []>} : vector<32x144xbf16>, vector<144x128xbf16>, vector<32x128xf32> -> vector<32x128xf32>
    %53 = arith.addf %47, %52 : vector<32x128xf32>
    %54 = vector.extract_strided_slice %40 {offsets = [0, 2, 0], sizes = [2, 16, 144], strides = [1, 1, 1]} : vector<2x18x144xbf16> to vector<2x16x144xbf16>
    %55 = vector.shape_cast %54 : vector<2x16x144xbf16> to vector<32x144xbf16>
    %c2_26 = arith.constant 2 : index
    %c0_27 = arith.constant 0 : index
    %c0_28 = arith.constant 0 : index
    %56 = vector.load %arg5[%c2_26, %c0_27, %c0_28] : memref<3x144x128xbf16, #tpu.memory_space<vmem>>, vector<1x144x128xbf16>
    %57 = vector.shape_cast %56 : vector<1x144x128xbf16> to vector<144x128xbf16>
    %cst_29 = arith.constant dense<0.000000e+00> : vector<32x128xf32>
    %58 = tpu.matmul %55, %57, %cst_29 {dimension_numbers = #tpu.dot_dimension_numbers<[1], [0], [0], [1], [0, 0, 1, 1], [], []>} : vector<32x144xbf16>, vector<144x128xbf16>, vector<32x128xf32> -> vector<32x128xf32>
    %59 = arith.addf %53, %58 : vector<32x128xf32>
    %c0_30 = arith.constant 0 : index
    %c0_31 = arith.constant 0 : index
    %60 = vector.load %arg6[%c0_30, %c0_31] : memref<1x128xf32, #tpu.memory_space<vmem>>, vector<1x128xf32>
    %61 = vector.broadcast %60 : vector<1x128xf32> to vector<32x128xf32>
    %62 = arith.addf %59, %61 : vector<32x128xf32>
    %cst_32 = arith.constant 0.000000e+00 : f32
    %63 = vector.broadcast %cst_32 : f32 to vector<32x128xf32>
    %64 = arith.maximumf %62, %63 : vector<32x128xf32>
    %65 = vector.shape_cast %64 : vector<32x128xf32> to vector<2x16x128xf32>
    %c0_33 = arith.constant 0 : index
    %c0_34 = arith.constant 0 : index
    %c0_35 = arith.constant 0 : index
    %66 = vector.load %arg7[%c0_33, %c0_34, %c0_35] : memref<2x16x128xf32, #tpu.memory_space<vmem>>, vector<2x16x128xf32>
    tpu.vector_store %arg7[%c0_33, %c0_34, %c0_35], %65 {strides = array<i32>} : memref<2x16x128xf32, #tpu.memory_space<vmem>>, vector<2x16x128xf32>,
    return
  }
  func.func @transform_0(%arg0: i32, %arg1: i32) -> (i32, i32, i32) {
    %c1_i32 = arith.constant 1 : i32
    %0 = arith.muli %arg1, %c1_i32 : i32
    %1 = arith.addi %0, %arg0 : i32
    %c0_i32 = arith.constant 0 : i32
    %c0_i32_0 = arith.constant 0 : i32
    %c0_i32_1 = arith.constant 0 : i32
    return %1, %c0_i32, %c0_i32_0 : i32, i32, i32
  }
  func.func @transform_1(%arg0: i32, %arg1: i32) -> (i32, i32, i32) {
    %c0_i32 = arith.constant 0 : i32
    %c0_i32_0 = arith.constant 0 : i32
    %c0_i32_1 = arith.constant 0 : i32
    %c0_i32_2 = arith.constant 0 : i32
    return %c0_i32, %c0_i32_0, %c0_i32_1 : i32, i32, i32
  }
  func.func @transform_2(%arg0: i32, %arg1: i32) -> (i32, i32) {
    %c0_i32 = arith.constant 0 : i32
    %c0_i32_0 = arith.constant 0 : i32
    %c0_i32_1 = arith.constant 0 : i32
    return %c0_i32, %c0_i32_0 : i32, i32
  }
  func.func @transform_3(%arg0: i32, %arg1: i32) -> (i32, i32, i32) {
    %c0_i32 = arith.constant 0 : i32
    %c0_i32_0 = arith.constant 0 : i32
    %c0_i32_1 = arith.constant 0 : i32
    %c0_i32_2 = arith.constant 0 : i32
    return %c0_i32, %c0_i32_0, %c0_i32_1 : i32, i32, i32
  }
  func.func @transform_4(%arg0: i32, %arg1: i32) -> (i32, i32) {
    %c0_i32 = arith.constant 0 : i32
    %c0_i32_0 = arith.constant 0 : i32
    %c0_i32_1 = arith.constant 0 : i32
    return %c0_i32, %c0_i32_0 : i32, i32
  }
  func.func @transform_5(%arg0: i32, %arg1: i32) -> (i32, i32, i32) {
    %c0_i32 = arith.constant 0 : i32
    %c0_i32_0 = arith.constant 0 : i32
    return %arg0, %arg1, %c0_i32 : i32, i32, i32
  }
}

</mosaic_0001>

<llo_original>
// kernel: tile.8
$region0: #{tile.8}
  #allocation0 [shape = 's32[1]{0}', space=sflag, size = 0x4, scoped, tag = 'scoped memory for tile.8']
  %s0 = inlined_call_operand.vmem [shape: f32[8], index: 0, kind: input, shape index: {}]
  %s1 = inlined_call_operand.vmem [shape: f32[16,8], index: 1, kind: output, shape index: {}]
  // Predicated region
  $region2: #{tile.8} parent=0 // pred_check
    _
  $region3: #{tile.8} parent=0 // pred_check_branch
    %3 = sbr.rel (0) target = $region5
  $region4: #{tile.8} parent=0 // pred_region
    _
  $region5: #{tile.8} parent=0 // pred_fallthru
    _
  %v4 = vld [vmem:[%s0] ss:$0 sm:$0xff]
  %5 = vst [vmem:[%s1] sm:$0xff] %v4
  %s6 = scalar_lea.vmem %s1, 8
  %7 = vst [vmem:[%s6] sm:$0xff] %v4

// kernel: tile.9
$region0: #{tile.9}
  %s0 = inlined_call_operand.vmem [shape: f32[16,8], index: 0, kind: input, shape index: {}]
  %s1 = inlined_call_operand.vmem [shape: f32[1,128], index: 1, kind: output, shape index: {}]
  $region1: #{tile.9} parent=0
    #allocation0 [shape = 'u8[4096]{0}', space=vmem, size = 0x1000, scoped, tag = 'scoped mem for output reshape']
    %v2 = vld [vmem:[%s0] sm:$0x1]
    %vm3 = vcmask 64512
    %4 = vst.msk [vmem:[#allocation0] sm:$0x1] %vm3, %v2
    %s5 = scalar_lea.vmem %s0, 15
    %v6 = vld [vmem:[%s5] sm:$0x1]
    %7 = vrot.lane.b32.xlu0 %v6, 120
    %v8 = vpop.permute.xlu0 %7
    %vm9 = vcmask 1048512
    %10 = vst.msk [vmem:[#allocation0] sm:$0x1] %vm9, %v8
    %s11 = scalar_lea.vmem %s0, 14
    %v12 = vld [vmem:[%s11] sm:$0x1]
    %13 = vrot.lane.b32.xlu0 %v12, 112
    %v14 = vpop.permute.xlu0 %13
    %vm15 = vcmask 982912
    %16 = vst.msk [vmem:[#allocation0] sm:$0x1] %vm15, %v14
    %s17 = scalar_lea.vmem %s0, 13
    %v18 = vld [vmem:[%s17] sm:$0x1]
    %19 = vrot.lane.b32.xlu0 %v18, 104
    %v20 = vpop.permute.xlu0 %19
    %vm21 = vcmask 917312
    %22 = vst.msk [vmem:[#allocation0] sm:$0x1] %vm21, %v20
    %s23 = scalar_lea.vmem %s0, 12
    %v24 = vld [vmem:[%s23] sm:$0x1]
    %25 = vrot.lane.b32.xlu0 %v24, 96
    %v26 = vpop.permute.xlu0 %25
    %vm27 = vcmask 851712
    %28 = vst.msk [vmem:[#allocation0] sm:$0x1] %vm27, %v26
    %s29 = scalar_lea.vmem %s0, 11
    %v30 = vld [vmem:[%s29] sm:$0x1]
    %31 = vrot.lane.b32.xlu0 %v30, 88
    %v32 = vpop.permute.xlu0 %31
    %vm33 = vcmask 786112
    %34 = vst.msk [vmem:[#allocation0] sm:$0x1] %vm33, %v32
    %s35 = scalar_lea.vmem %s0, 10
    %v36 = vld [vmem:[%s35] sm:$0x1]
    %37 = vrot.lane.b32.xlu0 %v36, 80
    %v38 = vpop.permute.xlu0 %37
    %vm39 = vcmask 720512
    %40 = vst.msk [vmem:[#allocation0] sm:$0x1] %vm39, %v38
    %s41 = scalar_lea.vmem %s0, 9
    %v42 = vld [vmem:[%s41] sm:$0x1]
    %43 = vrot.lane.b32.xlu0 %v42, 72
    %v44 = vpop.permute.xlu0 %43
    %vm45 = vcmask 654912
    %46 = vst.msk [vmem:[#allocation0] sm:$0x1] %vm45, %v44
    %s47 = scalar_lea.vmem %s0, 8
    %v48 = vld [vmem:[%s47] sm:$0x1]
    %49 = vrot.lane.b32.xlu0 %v48, 64
    %v50 = vpop.permute.xlu0 %49
    %vm51 = vcmask 589312
    %52 = vst.msk [vmem:[#allocation0] sm:$0x1] %vm51, %v50
    %s53 = scalar_lea.vmem %s0, 7
    %v54 = vld [vmem:[%s53] sm:$0x1]
    %55 = vrot.lane.b32.xlu0 %v54, 56
    %v56 = vpop.permute.xlu0 %55
    %vm57 = vcmask 523712
    %58 = vst.msk [vmem:[#allocation0] sm:$0x1] %vm57, %v56
    %s59 = scalar_lea.vmem %s0, 6
    %v60 = vld [vmem:[%s59] sm:$0x1]
    %61 = vrot.lane.b32.xlu0 %v60, 48
    %v62 = vpop.permute.xlu0 %61
    %vm63 = vcmask 458112
    %64 = vst.msk [vmem:[#allocation0] sm:$0x1] %vm63, %v62
    %s65 = scalar_lea.vmem %s0, 5
    %v66 = vld [vmem:[%s65] sm:$0x1]
    %67 = vrot.lane.b32.xlu0 %v66, 40
    %v68 = vpop.permute.xlu0 %67
    %vm69 = vcmask 392512
    %70 = vst.msk [vmem:[#allocation0] sm:$0x1] %vm69, %v68
    %s71 = scalar_lea.vmem %s0, 4
    %v72 = vld [vmem:[%s71] sm:$0x1]
    %73 = vrot.lane.b32.xlu0 %v72, 32
    %v74 = vpop.permute.xlu0 %73
    %vm75 = vcmask 326912
    %76 = vst.msk [vmem:[#allocation0] sm:$0x1] %vm75, %v74
    %s77 = scalar_lea.vmem %s0, 3
    %v78 = vld [vmem:[%s77] sm:$0x1]
    %79 = vrot.lane.b32.xlu0 %v78, 24
    %v80 = vpop.permute.xlu0 %79
    %vm81 = vcmask 261312
    %82 = vst.msk [vmem:[#allocation0] sm:$0x1] %vm81, %v80
    %s83 = scalar_lea.vmem %s0, 2
    %v84 = vld [vmem:[%s83] sm:$0x1]
    %85 = vrot.lane.b32.xlu0 %v84, 16
    %v86 = vpop.permute.xlu0 %85
    %vm87 = vcmask 195712
    %88 = vst.msk [vmem:[#allocation0] sm:$0x1] %vm87, %v86
    %s89 = scalar_lea.vmem %s0, 1
    %v90 = vld [vmem:[%s89] sm:$0x1]
    %91 = vrot.lane.b32.xlu0 %v90, 8
    %v92 = vpop.permute.xlu0 %91
    %vm93 = vcmask 130112
    %94 = vst.msk [vmem:[#allocation0] sm:$0x1] %vm93, %v92
    %s96 = sshllo.u32 0, 1
    %v98 = vld [vmem:[#allocation0] sm:%s96]
    %s99 = sshllo.u32 0, 1
    %100 = vst [vmem:[%s1] sm:%s99] %v98

// kernel: _conv_block_impl.1
$region0: #{_conv_block_impl.1}
  #allocation0 [shape = 'u32[]', space=smem, size = 0x4, offset = 0x4, fixed_abs, tag = 'smem constant byte address 0x4 - core index']
  #allocation1 [shape = 'u32[144,128]{1,0:T(1,128)}', space=vmem, size = 0x12000, scoped, tag = 'internal scratch']
  %s0 = inlined_call_operand.vmem [shape: bf16[2,20,72], index: 0, kind: input, shape index: {}]
  %s1 = inlined_call_operand.vmem [shape: bf16[3,72,144], index: 1, kind: input, shape index: {}]
  %s2 = inlined_call_operand.vmem [shape: f32[1,144], index: 2, kind: input, shape index: {}]
  %s3 = inlined_call_operand.vmem [shape: bf16[3,144,128], index: 3, kind: input, shape index: {}]
  %s4 = inlined_call_operand.vmem [shape: f32[1,128], index: 4, kind: input, shape index: {}]
  %s5 = inlined_call_operand.vmem [shape: f32[2,16,128], index: 5, kind: output, shape index: {}]
  %s6 = sld [smem:[#allocation0]]
  $region30: #{_conv_block_impl.1} parent=0
    _
  %s8 = ssub.s32 1, %s6
  %s9 = scalar_select 0, %s8, %s6
  // Predicated region
  $region2: #{_conv_block_impl.1} parent=0 // pred_check
    _
  $region3: #{_conv_block_impl.1} parent=0 // pred_check_branch
    %11 = sbr.rel (0) target = $region5
  $region4: #{_conv_block_impl.1} parent=0 // pred_region
    %s12 = sadd.s32 0, 0
    %s13 = smul.u32 2, %s12
    %p14 = scmp.lt.s32.totalorder %s13, 1
    %s15 = scalar_select %p14, %s13, 1
    %s16 = smul.addr %s15, 3
    %s17 = smul.addr %s16, 4
    %s18 = scalar_lea.vmem %s0, %s17
    %s19 = sadd.s32 0, 0
    %s20 = smul.u32 2, %s19
  $region5: #{_conv_block_impl.1} parent=0 // pred_fallthru
    _
  // Predicated region
  $region6: #{_conv_block_impl.1} parent=0 // pred_check
    _
  $region7: #{_conv_block_impl.1} parent=0 // pred_check_branch
    %22 = sbr.rel (0) target = $region9
  $region8: #{_conv_block_impl.1} parent=0 // pred_region
    _
  $region9: #{_conv_block_impl.1} parent=0 // pred_fallthru
    _
  // Predicated region
  $region10: #{_conv_block_impl.1} parent=0 // pred_check
    _
  $region11: #{_conv_block_impl.1} parent=0 // pred_check_branch
    %24 = sbr.rel (0) target = $region13
  $region12: #{_conv_block_impl.1} parent=0 // pred_region
    _
  $region13: #{_conv_block_impl.1} parent=0 // pred_fallthru
    _
  // Predicated region
  $region14: #{_conv_block_impl.1} parent=0 // pred_check
    _
  $region15: #{_conv_block_impl.1} parent=0 // pred_check_branch
    %26 = sbr.rel (0) target = $region17
  $region16: #{_conv_block_impl.1} parent=0 // pred_region
    _
  $region17: #{_conv_block_impl.1} parent=0 // pred_fallthru
    _
  // Predicated region
  $region18: #{_conv_block_impl.1} parent=0 // pred_check
    _
  $region19: #{_conv_block_impl.1} parent=0 // pred_check_branch
    %28 = sbr.rel (0) target = $region21
  $region20: #{_conv_block_impl.1} parent=0 // pred_region
    _
  $region21: #{_conv_block_impl.1} parent=0 // pred_fallthru
    _
  %s29 = sadd.s32 0, 0
  %s30 = smul.u32 2, %s29
  %p31 = scmp.lt.s32.totalorder %s30, 1
  %s32 = scalar_select %p31, %s30, 1
  %s33 = smul.addr %s32, 3
  %s34 = smul.addr %s33, 4
  %s35 = scalar_lea.vmem %s0, %s34
  %s36 = sadd.s32 0, 0
  %s37 = smul.u32 2, %s36
  %p38 = scmp.lt.s32.totalorder %s37, 1
  %s39 = scalar_select %p38, %s37, 1
  %s40 = smul.addr %s39, 3
  %s41 = smul.addr %s40, 4
  %s42 = scalar_lea.vmem %s0, %s41
  %s43 = sadd.s32 0, 0
  %s44 = smul.u32 2, %s43
  %v46 = vld [vmem:[%s42] sm:$0xf]
  %v47 = vld [vmem:[%s42 + $0x4] sm:$0xf]
  %v48 = vld [vmem:[%s42 + $0x8] sm:$0x3]
  %v49 = vld [vmem:[%s42 + $0xc] sm:$0xf]
  %v50 = vld [vmem:[%s42 + $0x10] sm:$0xf]
  %v51 = vld [vmem:[%s42 + $0x14] sm:$0x3]
  %v59 = vunpack.c.l.s4 1966171168
  %v60 = vunpack.c.0.s8 %v59
  %v61 = vlaneseq
  %v62 = vshrl.u32 %v61, 7
  %v63 = vsub.s32 %v60, %v62
  %v64 = vrot.slane %v46, %v63
  %v65 = vcombine.high %v64, %v64
  %v67 = vunpack.c.l.s4 1966171168
  %v68 = vunpack.c.0.s8 %v67
  %v69 = vlaneseq
  %v70 = vshrl.u32 %v69, 7
  %v71 = vsub.s32 %v68, %v70
  %v72 = vrot.slane %v64, %v71
  %v74 = vunpack.c.l.s4 1966171168
  %v75 = vunpack.c.0.s8 %v74
  %v76 = vlaneseq
  %v77 = vshrl.u32 %v76, 7
  %v78 = vsub.s32 %v75, %v77
  %v79 = vrot.slane %v65, %v78
  %v80 = vcombine.high %v72, %v72
  %v81 = vcombine.high %v79, %v79
  %v83 = vunpack.c.l.s4 1966171168
  %v84 = vunpack.c.0.s8 %v83
  %v85 = vlaneseq
  %v86 = vshrl.u32 %v85, 7
  %v87 = vsub.s32 %v84, %v86
  %v88 = vrot.slane %v47, %v87
  %v89 = vcombine.high %v88, %v88
  %v91 = vunpack.c.l.s4 1966171168
  %v92 = vunpack.c.0.s8 %v91
  %v93 = vlaneseq
  %v94 = vshrl.u32 %v93, 7
  %v95 = vsub.s32 %v92, %v94
  %v96 = vrot.slane %v88, %v95
  %v98 = vunpack.c.l.s4 1966171168
  %v99 = vunpack.c.0.s8 %v98
  %v100 = vlaneseq
  %v101 = vshrl.u32 %v100, 7
  %v102 = vsub.s32 %v99, %v101
  %v103 = vrot.slane %v89, %v102
  %v104 = vcombine.high %v96, %v96
  %v105 = vcombine.high %v103, %v103
  %v107 = vunpack.c.l.s4 1966171168
  %v108 = vunpack.c.0.s8 %v107
  %v109 = vlaneseq
  %v110 = vshrl.u32 %v109, 7
  %v111 = vsub.s32 %v108, %v110
  %v112 = vrot.slane %v48, %v111
  %v114 = vunpack.c.l.s4 1966171168
  %v115 = vunpack.c.0.s8 %v114
  %v116 = vlaneseq
  %v117 = vshrl.u32 %v116, 7
  %v118 = vsub.s32 %v115, %v117
  %v119 = vrot.slane %v112, %v118
  %v121 = vunpack.c.l.s4 1966171168
  %v122 = vunpack.c.0.s8 %v121
  %v123 = vlaneseq
  %v124 = vshrl.u32 %v123, 7
  %v125 = vsub.s32 %v122, %v124
  %v126 = vrot.slane %v49, %v125
  %v127 = vcombine.high %v126, %v126
  %v129 = vunpack.c.l.s4 1966171168
  %v130 = vunpack.c.0.s8 %v129
  %v131 = vlaneseq
  %v132 = vshrl.u32 %v131, 7
  %v133 = vsub.s32 %v130, %v132
  %v134 = vrot.slane %v126, %v133
  %v136 = vunpack.c.l.s4 1966171168
  %v137 = vunpack.c.0.s8 %v136
  %v138 = vlaneseq
  %v139 = vshrl.u32 %v138, 7
  %v140 = vsub.s32 %v137, %v139
  %v141 = vrot.slane %v127, %v140
  %v142 = vcombine.high %v134, %v134
  %v143 = vcombine.high %v141, %v141
  %v145 = vunpack.c.l.s4 1966171168
  %v146 = vunpack.c.0.s8 %v145
  %v147 = vlaneseq
  %v148 = vshrl.u32 %v147, 7
  %v149 = vsub.s32 %v146, %v148
  %v150 = vrot.slane %v50, %v149
  %v151 = vcombine.high %v150, %v150
  %v153 = vunpack.c.l.s4 1966171168
  %v154 = vunpack.c.0.s8 %v153
  %v155 = vlaneseq
  %v156 = vshrl.u32 %v155, 7
  %v157 = vsub.s32 %v154, %v156
  %v158 = vrot.slane %v150, %v157
  %v160 = vunpack.c.l.s4 1966171168
  %v161 = vunpack.c.0.s8 %v160
  %v162 = vlaneseq
  %v163 = vshrl.u32 %v162, 7
  %v164 = vsub.s32 %v161, %v163
  %v165 = vrot.slane %v151, %v164
  %v166 = vcombine.high %v158, %v158
  %v167 = vcombine.high %v165, %v165
  %v169 = vunpack.c.l.s4 1966171168
  %v170 = vunpack.c.0.s8 %v169
  %v171 = vlaneseq
  %v172 = vshrl.u32 %v171, 7
  %v173 = vsub.s32 %v170, %v172
  %v174 = vrot.slane %v51, %v173
  %v176 = vunpack.c.l.s4 1966171168
  %v177 = vunpack.c.0.s8 %v176
  %v178 = vlaneseq
  %v179 = vshrl.u32 %v178, 7
  %v180 = vsub.s32 %v177, %v179
  %v181 = vrot.slane %v174, %v180
  %v182 = vld [vmem:[%s1] sm:$0xff]
  %v183 = vld [vmem:[%s1 + $0x8] sm:$0xff]
  %v184 = vld [vmem:[%s1 + $0x10] sm:$0xff]
  %v185 = vld [vmem:[%s1 + $0x18] sm:$0xff]
  %v186 = vld [vmem:[%s1 + $0x20] sm:$0xff]
  %v187 = vld [vmem:[%s1 + $0x28] sm:$0xff]
  %v188 = vld [vmem:[%s1 + $0x30] sm:$0xff]
  %v189 = vld [vmem:[%s1 + $0x38] sm:$0xff]
  %v190 = vld [vmem:[%s1 + $0x40] sm:$0xff]
  %v191 = vcombine.high %v112, %v112
  %v193 = vunpack.c.l.s4 1966171168
  %v194 = vunpack.c.0.s8 %v193
  %v195 = vlaneseq
  %v196 = vshrl.u32 %v195, 7
  %v197 = vsub.s32 %v194, %v196
  %v198 = vrot.slane %v191, %v197
  %v199 = vcombine.high %v174, %v174
  %v201 = vunpack.c.l.s4 1966171168
  %v202 = vunpack.c.0.s8 %v201
  %v203 = vlaneseq
  %v204 = vshrl.u32 %v203, 7
  %v205 = vsub.s32 %v202, %v204
  %v206 = vrot.slane %v199, %v205
  %vm207 = vsmask.f32 256
  %vm208 = vsmask.f32 1284
  %vm209 = vmor %vm207, %vm208
  %vm210 = vsmask.f32 2312
  %vm211 = vmor %vm209, %vm210
  %vm212 = vsmask.f32 3340
  %vm213 = vmor %vm211, %vm212
  %vm214 = vsmask.f32 4368
  %vm215 = vmor %vm213, %vm214
  %vm216 = vsmask.f32 5396
  %vm217 = vmor %vm215, %vm216
  %vm218 = vsmask.f32 6424
  %vm219 = vmor %vm217, %vm218
  %vm220 = vsmask.f32 7452
  %vm221 = vmor %vm219, %vm220
  %v223 = vshrl.u32 %v72, 16
  %v225 = vrot.slane %v223, 7
  %v226 = vrot.slane %v225, 1
  %v228 = vshll.u32 %v79, 16
  %v230 = vsel %vm221, %v226, %v228
  %v231 = vshrl.u32 %v79, 16
  %v233 = vrot.slane %v231, 7
  %v234 = vrot.slane %v233, 1
  %v236 = vshll.u32 %v80, 16
  %v238 = vsel %vm221, %v234, %v236
  %v239 = vshrl.u32 %v80, 16
  %v241 = vrot.slane %v239, 7
  %v242 = vrot.slane %v241, 1
  %v244 = vshll.u32 %v81, 16
  %v246 = vsel %vm221, %v242, %v244
  %v247 = vshrl.u32 %v81, 16
  %v249 = vrot.slane %v247, 7
  %v250 = vrot.slane %v249, 1
  %v252 = vshll.u32 %v96, 16
  %v254 = vsel %vm221, %v250, %v252
  %v255 = vshrl.u32 %v96, 16
  %v257 = vrot.slane %v255, 7
  %v258 = vrot.slane %v257, 1
  %v260 = vshll.u32 %v103, 16
  %v262 = vsel %vm221, %v258, %v260
  %v263 = vshrl.u32 %v103, 16
  %v265 = vrot.slane %v263, 7
  %v266 = vrot.slane %v265, 1
  %v268 = vshll.u32 %v104, 16
  %v270 = vsel %vm221, %v266, %v268
  %v271 = vshrl.u32 %v104, 16
  %v273 = vrot.slane %v271, 7
  %v274 = vrot.slane %v273, 1
  %v276 = vshll.u32 %v105, 16
  %v278 = vsel %vm221, %v274, %v276
  %v279 = vshrl.u32 %v105, 16
  %v281 = vrot.slane %v279, 7
  %v282 = vrot.slane %v281, 1
  %v284 = vshll.u32 %v119, 16
  %v286 = vsel %vm221, %v282, %v284
  %v287 = vshrl.u32 %v119, 16
  %v289 = vrot.slane %v287, 7
  %v290 = vrot.slane %v289, 1
  %v292 = vshll.u32 %v198, 16
  %v294 = vsel %vm221, %v290, %v292
  %v296 = vshrl.u32 %v134, 16
  %v298 = vrot.slane %v296, 7
  %v299 = vrot.slane %v298, 1
  %v301 = vshll.u32 %v141, 16
  %v303 = vsel %vm221, %v299, %v301
  %v304 = vshrl.u32 %v141, 16
  %v306 = vrot.slane %v304, 7
  %v307 = vrot.slane %v306, 1
  %v309 = vshll.u32 %v142, 16
  %v311 = vsel %vm221, %v307, %v309
  %v312 = vshrl.u32 %v142, 16
  %v314 = vrot.slane %v312, 7
  %v315 = vrot.slane %v314, 1
  %v317 = vshll.u32 %v143, 16
  %v319 = vsel %vm221, %v315, %v317
  %v320 = vshrl.u32 %v143, 16
  %v322 = vrot.slane %v320, 7
  %v323 = vrot.slane %v322, 1
  %v325 = vshll.u32 %v158, 16
  %v327 = vsel %vm221, %v323, %v325
  %v328 = vshrl.u32 %v158, 16
  %v330 = vrot.slane %v328, 7
  %v331 = vrot.slane %v330, 1
  %v333 = vshll.u32 %v165, 16
  %v335 = vsel %vm221, %v331, %v333
  %v336 = vshrl.u32 %v165, 16
  %v338 = vrot.slane %v336, 7
  %v339 = vrot.slane %v338, 1
  %v341 = vshll.u32 %v166, 16
  %v343 = vsel %vm221, %v339, %v341
  %v344 = vshrl.u32 %v166, 16
  %v346 = vrot.slane %v344, 7
  %v347 = vrot.slane %v346, 1
  %v349 = vshll.u32 %v167, 16
  %v351 = vsel %vm221, %v347, %v349
  %v352 = vshrl.u32 %v167, 16
  %v354 = vrot.slane %v352, 7
  %v355 = vrot.slane %v354, 1
  %v357 = vshll.u32 %v181, 16
  %v359 = vsel %vm221, %v355, %v357
  %v360 = vshrl.u32 %v181, 16
  %v362 = vrot.slane %v360, 7
  %v363 = vrot.slane %v362, 1
  %v365 = vshll.u32 %v206, 16
  %v367 = vsel %vm221, %v363, %v365
  %s368 = scalar_lea.vmem %s1, 72
  %v369 = vld [vmem:[%s368] sm:$0xff]
  %v370 = vld [vmem:[%s368 + $0x8] sm:$0xff]
  %v371 = vld [vmem:[%s368 + $0x10] sm:$0xff]
  %v372 = vld [vmem:[%s368 + $0x18] sm:$0xff]
  %v373 = vld [vmem:[%s368 + $0x20] sm:$0xff]
  %v374 = vld [vmem:[%s368 + $0x28] sm:$0xff]
  %v375 = vld [vmem:[%s368 + $0x30] sm:$0xff]
  %v376 = vld [vmem:[%s368 + $0x38] sm:$0xff]
  %v377 = vld [vmem:[%s368 + $0x40] sm:$0xff]
  %v378 = vcombine.low %v230, %v238
  %v379 = vcombine.low %v246, %v254
  %v380 = vcombine.low %v262, %v270
  %v381 = vcombine.low %v278, %v286
  %v383 = vunpack.c.l.s4 1966171168
  %v384 = vunpack.c.0.s8 %v383
  %v385 = vlaneseq
  %v386 = vshrl.u32 %v385, 7
  %v387 = vsub.s32 %v384, %v386
  %v388 = vrot.slane %v378, %v387
  %v390 = vunpack.c.l.s4 1966171168
  %v391 = vunpack.c.0.s8 %v390
  %v392 = vlaneseq
  %v393 = vshrl.u32 %v392, 7
  %v394 = vsub.s32 %v391, %v393
  %v395 = vrot.slane %v379, %v394
  %v397 = vunpack.c.l.s4 1966171168
  %v398 = vunpack.c.0.s8 %v397
  %v399 = vlaneseq
  %v400 = vshrl.u32 %v399, 7
  %v401 = vsub.s32 %v398, %v400
  %v402 = vrot.slane %v380, %v401
  %v404 = vunpack.c.l.s4 1966171168
  %v405 = vunpack.c.0.s8 %v404
  %v406 = vlaneseq
  %v407 = vshrl.u32 %v406, 7
  %v408 = vsub.s32 %v405, %v407
  %v409 = vrot.slane %v381, %v408
  %v410 = vcombine.low %v388, %v395
  %v411 = vcombine.low %v402, %v409
  %v413 = vunpack.c.l.s4 1966171168
  %v414 = vunpack.c.0.s8 %v413
  %v415 = vlaneseq
  %v416 = vshrl.u32 %v415, 7
  %v417 = vsub.s32 %v414, %v416
  %v418 = vrot.slane %v410, %v417
  %v420 = vunpack.c.l.s4 1966171168
  %v421 = vunpack.c.0.s8 %v420
  %v422 = vlaneseq
  %v423 = vshrl.u32 %v422, 7
  %v424 = vsub.s32 %v421, %v423
  %v425 = vrot.slane %v411, %v424
  %v426 = vcombine.low %v418, %v425
  %v427 = vcombine.low %v294, %v303
  %v428 = vcombine.low %v311, %v319
  %v429 = vcombine.low %v327, %v335
  %v430 = vcombine.low %v343, %v351
  %v432 = vunpack.c.l.s4 1966171168
  %v433 = vunpack.c.0.s8 %v432
  %v434 = vlaneseq
  %v435 = vshrl.u32 %v434, 7
  %v436 = vsub.s32 %v433, %v435
  %v437 = vrot.slane %v427, %v436
  %v439 = vunpack.c.l.s4 1966171168
  %v440 = vunpack.c.0.s8 %v439
  %v441 = vlaneseq
  %v442 = vshrl.u32 %v441, 7
  %v443 = vsub.s32 %v440, %v442
  %v444 = vrot.slane %v428, %v443
  %v446 = vunpack.c.l.s4 1966171168
  %v447 = vunpack.c.0.s8 %v446
  %v448 = vlaneseq
  %v449 = vshrl.u32 %v448, 7
  %v450 = vsub.s32 %v447, %v449
  %v451 = vrot.slane %v429, %v450
  %v453 = vunpack.c.l.s4 1966171168
  %v454 = vunpack.c.0.s8 %v453
  %v455 = vlaneseq
  %v456 = vshrl.u32 %v455, 7
  %v457 = vsub.s32 %v454, %v456
  %v458 = vrot.slane %v430, %v457
  %v459 = vcombine.low %v437, %v444
  %v460 = vcombine.low %v451, %v458
  %v462 = vunpack.c.l.s4 1966171168
  %v463 = vunpack.c.0.s8 %v462
  %v464 = vlaneseq
  %v465 = vshrl.u32 %v464, 7
  %v466 = vsub.s32 %v463, %v465
  %v467 = vrot.slane %v459, %v466
  %v469 = vunpack.c.l.s4 1966171168
  %v470 = vunpack.c.0.s8 %v469
  %v471 = vlaneseq
  %v472 = vshrl.u32 %v471, 7
  %v473 = vsub.s32 %v470, %v472
  %v474 = vrot.slane %v460, %v473
  %v475 = vcombine.low %v467, %v474
  %v476 = vcombine.low %v359, %v367
  %v478 = vunpack.c.l.s4 1966171168
  %v479 = vunpack.c.0.s8 %v478
  %v480 = vlaneseq
  %v481 = vshrl.u32 %v480, 7
  %v482 = vsub.s32 %v479, %v481
  %v483 = vrot.slane %v476, %v482
  %v485 = vunpack.c.l.s4 1966171168
  %v486 = vunpack.c.0.s8 %v485
  %v487 = vlaneseq
  %v488 = vshrl.u32 %v487, 7
  %v489 = vsub.s32 %v486, %v488
  %v490 = vrot.slane %v483, %v489
  %v500 = vunpack.c.l.b16 %v369
  %v501 = vunpack.c.h.b16 %v369
  %v502 = vunpack.c.l.b16 %v370
  %v503 = vunpack.c.h.b16 %v370
  %v504 = vunpack.c.l.b16 %v371
  %v505 = vunpack.c.h.b16 %v371
  %v506 = vunpack.c.l.b16 %v372
  %v507 = vunpack.c.h.b16 %v372
  %v508 = vunpack.c.l.b16 %v373
  %v509 = vunpack.c.h.b16 %v373
  %v510 = vunpack.c.l.b16 %v374
  %v511 = vunpack.c.h.b16 %v374
  %v512 = vunpack.c.l.b16 %v375
  %v513 = vunpack.c.h.b16 %v375
  %v514 = vunpack.c.l.b16 %v376
  %v515 = vunpack.c.h.b16 %v376
  %v516 = vunpack.c.l.b16 %v377
  %v517 = vunpack.c.h.b16 %v377
  %v518 = vpack.c.b16 %v502, %v500
  %v519 = vpack.c.b16 %v503, %v501
  %v520 = vpack.c.b16 %v506, %v504
  %v521 = vpack.c.b16 %v507, %v505
  %v522 = vpack.c.b16 %v510, %v508
  %v523 = vpack.c.b16 %v511, %v509
  %v524 = vpack.c.b16 %v514, %v512
  %v525 = vpack.c.b16 %v515, %v513
  %v526 = vpack.c.b16 %v516, %v516
  %v527 = vpack.c.b16 %v517, %v517
  %vm536 = vcmask 588800
  %v538 = vsel %vm536, %v426, 0
  %v541 = vsel %vm536, %v475, 0
  %v544 = vsel %vm536, %v490, 0
  %vm546 = vcmask 1043456
  %v548 = vsel %vm546, %v526, 0
  %v551 = vsel %vm546, %v527, 0
  %553 = vmatprep.subr.bf16.mxu0 %v519
  %554 = vmatpush1.bf16.msra.mxu0 %v518
  %555 = vmatprep.subr.bf16.mxu0 %v521
  %556 = vmatpush1.bf16.msra.mxu0 %v520
  %557 = vmatprep.subr.bf16.mxu0 %v523
  %558 = vmatpush1.bf16.msra.mxu0 %v522
  %559 = vmatprep.subr.bf16.mxu0 %v525
  %560 = vmatpush1.bf16.msra.mxu0 %v524
  %561 = vmatprep.subr.bf16.mxu0 %v551
  %562 = vmatpush1.bf16.msra.mxu0 %v548
  %563 = vmatprep.subr.bf16.mxu0 0
  %564 = vmatpush1.bf16.msra.mxu0 0
  %565 = vmatprep.subr.bf16.mxu0 0
  %566 = vmatpush1.bf16.msra.mxu0 0
  %567 = vmatprep.subr.bf16.mxu0 0
  %568 = vmatpush1.bf16.msra.mxu0 0
  %569 = vmatprep.subr.bf16.mxu0 0
  %570 = vmatpush1.bf16.msra.mxu0 0
  %571 = vmatprep.subr.bf16.mxu0 0
  %572 = vmatpush1.bf16.msra.mxu0 0
  %573 = vmatprep.subr.bf16.mxu0 0
  %574 = vmatpush1.bf16.msra.mxu0 0
  %575 = vmatprep.subr.bf16.mxu0 0
  %576 = vmatpush1.bf16.msra.mxu0 0
  %577 = vmatprep.subr.bf16.mxu0 0
  %578 = vmatpush1.bf16.msra.mxu0 0
  %579 = vmatprep.subr.bf16.mxu0 0
  %580 = vmatpush1.bf16.msra.mxu0 0
  %581 = vmatprep.subr.bf16.mxu0 0
  %582 = vmatpush1.bf16.msra.mxu0 0
  %583 = vmatprep.subr.bf16.mxu0 0
  %584 = vmatpush1.bf16.msra.mxu0 0
  %585 = vmatprep.mubr.bf16.mxu0 0
  %586 = vmatmul.mubr.bf16.gmra.mrb[0].mxu0 %v538
  %v587 = vpop.f32.mrb[0].mxu0
  %v588 = vadd.f32 0.0, %v587
  %v589 = vpop.f32.mrb[0].mxu0
  %v590 = vadd.f32 0.0, %v589
  %v591 = vpop.f32.mrb[0].mxu0
  %v592 = vadd.f32 0.0, %v591
  %v593 = vpop.f32.mrb[0].mxu0
  %v594 = vadd.f32 0.0, %v593
  %595 = vmatprep.mubr.bf16.mxu0 0
  %596 = vmatmul.mubr.bf16.gmra.mrb[0].mxu0 %v541
  %v597 = vpop.f32.mrb[0].mxu0
  %v598 = vadd.f32 0.0, %v597
  %v599 = vpop.f32.mrb[0].mxu0
  %v600 = vadd.f32 0.0, %v599
  %v601 = vpop.f32.mrb[0].mxu0
  %v602 = vadd.f32 0.0, %v601
  %v603 = vpop.f32.mrb[0].mxu0
  %v604 = vadd.f32 0.0, %v603
  %605 = vmatprep.mubr.bf16.mxu0 0
  %606 = vmatmul.mubr.bf16.gmra.mrb[0].mxu0 %v544
  %v607 = vpop.f32.mrb[0].mxu0
  %v608 = vadd.f32 0.0, %v607
  %v609 = vpop.f32.mrb[0].mxu0
  %v610 = vadd.f32 0.0, %v609
  %v611 = vpop.f32.mrb[0].mxu0
  %v612 = vpop.f32.mrb[0].mxu0
  %613 = vdwg.mxu0
  %v614 = vcombine.low %v72, %v79
  %v615 = vcombine.low %v80, %v81
  %v616 = vcombine.low %v96, %v103
  %v617 = vcombine.low %v104, %v105
  %v619 = vunpack.c.l.s4 1966171168
  %v620 = vunpack.c.0.s8 %v619
  %v621 = vlaneseq
  %v622 = vshrl.u32 %v621, 7
  %v623 = vsub.s32 %v620, %v622
  %v624 = vrot.slane %v614, %v623
  %v626 = vunpack.c.l.s4 1966171168
  %v627 = vunpack.c.0.s8 %v626
  %v628 = vlaneseq
  %v629 = vshrl.u32 %v628, 7
  %v630 = vsub.s32 %v627, %v629
  %v631 = vrot.slane %v615, %v630
  %v633 = vunpack.c.l.s4 1966171168
  %v634 = vunpack.c.0.s8 %v633
  %v635 = vlaneseq
  %v636 = vshrl.u32 %v635, 7
  %v637 = vsub.s32 %v634, %v636
  %v638 = vrot.slane %v616, %v637
  %v640 = vunpack.c.l.s4 1966171168
  %v641 = vunpack.c.0.s8 %v640
  %v642 = vlaneseq
  %v643 = vshrl.u32 %v642, 7
  %v644 = vsub.s32 %v641, %v643
  %v645 = vrot.slane %v617, %v644
  %v646 = vcombine.low %v624, %v631
  %v647 = vcombine.low %v638, %v645
  %v649 = vunpack.c.l.s4 1966171168
  %v650 = vunpack.c.0.s8 %v649
  %v651 = vlaneseq
  %v652 = vshrl.u32 %v651, 7
  %v653 = vsub.s32 %v650, %v652
  %v654 = vrot.slane %v646, %v653
  %v656 = vunpack.c.l.s4 1966171168
  %v657 = vunpack.c.0.s8 %v656
  %v658 = vlaneseq
  %v659 = vshrl.u32 %v658, 7
  %v660 = vsub.s32 %v657, %v659
  %v661 = vrot.slane %v647, %v660
  %v662 = vcombine.low %v654, %v661
  %v663 = vcombine.low %v119, %v134
  %v664 = vcombine.low %v141, %v142
  %v665 = vcombine.low %v143, %v158
  %v666 = vcombine.low %v165, %v166
  %v668 = vunpack.c.l.s4 1966171168
  %v669 = vunpack.c.0.s8 %v668
  %v670 = vlaneseq
  %v671 = vshrl.u32 %v670, 7
  %v672 = vsub.s32 %v669, %v671
  %v673 = vrot.slane %v663, %v672
  %v675 = vunpack.c.l.s4 1966171168
  %v676 = vunpack.c.0.s8 %v675
  %v677 = vlaneseq
  %v678 = vshrl.u32 %v677, 7
  %v679 = vsub.s32 %v676, %v678
  %v680 = vrot.slane %v664, %v679
  %v682 = vunpack.c.l.s4 1966171168
  %v683 = vunpack.c.0.s8 %v682
  %v684 = vlaneseq
  %v685 = vshrl.u32 %v684, 7
  %v686 = vsub.s32 %v683, %v685
  %v687 = vrot.slane %v665, %v686
  %v689 = vunpack.c.l.s4 1966171168
  %v690 = vunpack.c.0.s8 %v689
  %v691 = vlaneseq
  %v692 = vshrl.u32 %v691, 7
  %v693 = vsub.s32 %v690, %v692
  %v694 = vrot.slane %v666, %v693
  %v695 = vcombine.low %v673, %v680
  %v696 = vcombine.low %v687, %v694
  %v698 = vunpack.c.l.s4 1966171168
  %v699 = vunpack.c.0.s8 %v698
  %v700 = vlaneseq
  %v701 = vshrl.u32 %v700, 7
  %v702 = vsub.s32 %v699, %v701
  %v703 = vrot.slane %v695, %v702
  %v705 = vunpack.c.l.s4 1966171168
  %v706 = vunpack.c.0.s8 %v705
  %v707 = vlaneseq
  %v708 = vshrl.u32 %v707, 7
  %v709 = vsub.s32 %v706, %v708
  %v710 = vrot.slane %v696, %v709
  %v711 = vcombine.low %v703, %v710
  %v712 = vcombine.low %v167, %v181
  %v714 = vunpack.c.l.s4 1966171168
  %v715 = vunpack.c.0.s8 %v714
  %v716 = vlaneseq
  %v717 = vshrl.u32 %v716, 7
  %v718 = vsub.s32 %v715, %v717
  %v719 = vrot.slane %v712, %v718
  %v721 = vunpack.c.l.s4 1966171168
  %v722 = vunpack.c.0.s8 %v721
  %v723 = vlaneseq
  %v724 = vshrl.u32 %v723, 7
  %v725 = vsub.s32 %v722, %v724
  %v726 = vrot.slane %v719, %v725
  %v736 = vunpack.c.l.b16 %v182
  %v737 = vunpack.c.h.b16 %v182
  %v738 = vunpack.c.l.b16 %v183
  %v739 = vunpack.c.h.b16 %v183
  %v740 = vunpack.c.l.b16 %v184
  %v741 = vunpack.c.h.b16 %v184
  %v742 = vunpack.c.l.b16 %v185
  %v743 = vunpack.c.h.b16 %v185
  %v744 = vunpack.c.l.b16 %v186
  %v745 = vunpack.c.h.b16 %v186
  %v746 = vunpack.c.l.b16 %v187
  %v747 = vunpack.c.h.b16 %v187
  %v748 = vunpack.c.l.b16 %v188
  %v749 = vunpack.c.h.b16 %v188
  %v750 = vunpack.c.l.b16 %v189
  %v751 = vunpack.c.h.b16 %v189
  %v752 = vunpack.c.l.b16 %v190
  %v753 = vunpack.c.h.b16 %v190
  %v754 = vpack.c.b16 %v738, %v736
  %v755 = vpack.c.b16 %v739, %v737
  %v756 = vpack.c.b16 %v742, %v740
  %v757 = vpack.c.b16 %v743, %v741
  %v758 = vpack.c.b16 %v746, %v744
  %v759 = vpack.c.b16 %v747, %v745
  %v760 = vpack.c.b16 %v750, %v748
  %v761 = vpack.c.b16 %v751, %v749
  %v762 = vpack.c.b16 %v752, %v752
  %v763 = vpack.c.b16 %v753, %v753
  %v773 = vsel %vm536, %v662, 0
  %v776 = vsel %vm536, %v711, 0
  %v779 = vsel %vm536, %v726, 0
  %v782 = vsel %vm546, %v762, 0
  %v785 = vsel %vm546, %v763, 0
  %787 = vmatprep.subr.bf16.mxu0 %v755
  %788 = vmatpush1.bf16.msra.mxu0 %v754
  %789 = vmatprep.subr.bf16.mxu0 %v757
  %790 = vmatpush1.bf16.msra.mxu0 %v756
  %791 = vmatprep.subr.bf16.mxu0 %v759
  %792 = vmatpush1.bf16.msra.mxu0 %v758
  %793 = vmatprep.subr.bf16.mxu0 %v761
  %794 = vmatpush1.bf16.msra.mxu0 %v760
  %795 = vmatprep.subr.bf16.mxu0 %v785
  %796 = vmatpush1.bf16.msra.mxu0 %v782
  %797 = vmatprep.subr.bf16.mxu0 0
  %798 = vmatpush1.bf16.msra.mxu0 0
  %799 = vmatprep.subr.bf16.mxu0 0
  %800 = vmatpush1.bf16.msra.mxu0 0
  %801 = vmatprep.subr.bf16.mxu0 0
  %802 = vmatpush1.bf16.msra.mxu0 0
  %803 = vmatprep.subr.bf16.mxu0 0
  %804 = vmatpush1.bf16.msra.mxu0 0
  %805 = vmatprep.subr.bf16.mxu0 0
  %806 = vmatpush1.bf16.msra.mxu0 0
  %807 = vmatprep.subr.bf16.mxu0 0
  %808 = vmatpush1.bf16.msra.mxu0 0
  %809 = vmatprep.subr.bf16.mxu0 0
  %810 = vmatpush1.bf16.msra.mxu0 0
  %811 = vmatprep.subr.bf16.mxu0 0
  %812 = vmatpush1.bf16.msra.mxu0 0
  %813 = vmatprep.subr.bf16.mxu0 0
  %814 = vmatpush1.bf16.msra.mxu0 0
  %815 = vmatprep.subr.bf16.mxu0 0
  %816 = vmatpush1.bf16.msra.mxu0 0
  %817 = vmatprep.subr.bf16.mxu0 0
  %818 = vmatpush1.bf16.msra.mxu0 0
  %819 = vmatprep.mubr.bf16.mxu0 0
  %820 = vmatmul.mubr.bf16.gmra.mrb[0].mxu0 %v773
  %v821 = vpop.f32.mrb[0].mxu0
  %v822 = vadd.f32 %v588, %v821
  %v823 = vpop.f32.mrb[0].mxu0
  %v824 = vadd.f32 %v590, %v823
  %v825 = vpop.f32.mrb[0].mxu0
  %v826 = vadd.f32 %v592, %v825
  %v827 = vpop.f32.mrb[0].mxu0
  %v828 = vadd.f32 %v594, %v827
  %829 = vmatprep.mubr.bf16.mxu0 0
  %830 = vmatmul.mubr.bf16.gmra.mrb[0].mxu0 %v776
  %v831 = vpop.f32.mrb[0].mxu0
  %v832 = vadd.f32 %v598, %v831
  %v833 = vpop.f32.mrb[0].mxu0
  %v834 = vadd.f32 %v600, %v833
  %v835 = vpop.f32.mrb[0].mxu0
  %v836 = vadd.f32 %v602, %v835
  %v837 = vpop.f32.mrb[0].mxu0
  %v838 = vadd.f32 %v604, %v837
  %839 = vmatprep.mubr.bf16.mxu0 0
  %840 = vmatmul.mubr.bf16.gmra.mrb[0].mxu0 %v779
  %v841 = vpop.f32.mrb[0].mxu0
  %v842 = vadd.f32 %v608, %v841
  %v843 = vpop.f32.mrb[0].mxu0
  %v844 = vadd.f32 %v610, %v843
  %v845 = vpop.f32.mrb[0].mxu0
  %v846 = vpop.f32.mrb[0].mxu0
  %847 = vdwg.mxu0
  %s848 = scalar_lea.vmem %s1, 144
  %v849 = vld [vmem:[%s848] sm:$0xff]
  %v850 = vld [vmem:[%s848 + $0x8] sm:$0xff]
  %v851 = vld [vmem:[%s848 + $0x10] sm:$0xff]
  %v852 = vld [vmem:[%s848 + $0x18] sm:$0xff]
  %v853 = vld [vmem:[%s848 + $0x20] sm:$0xff]
  %v854 = vld [vmem:[%s848 + $0x28] sm:$0xff]
  %v855 = vld [vmem:[%s848 + $0x30] sm:$0xff]
  %v856 = vld [vmem:[%s848 + $0x38] sm:$0xff]
  %v857 = vld [vmem:[%s848 + $0x40] sm:$0xff]
  %v858 = vcombine.low %v79, %v80
  %v859 = vcombine.low %v81, %v96
  %v860 = vcombine.low %v103, %v104
  %v861 = vcombine.low %v105, %v119
  %v863 = vunpack.c.l.s4 1966171168
  %v864 = vunpack.c.0.s8 %v863
  %v865 = vlaneseq
  %v866 = vshrl.u32 %v865, 7
  %v867 = vsub.s32 %v864, %v866
  %v868 = vrot.slane %v858, %v867
  %v870 = vunpack.c.l.s4 1966171168
  %v871 = vunpack.c.0.s8 %v870
  %v872 = vlaneseq
  %v873 = vshrl.u32 %v872, 7
  %v874 = vsub.s32 %v871, %v873
  %v875 = vrot.slane %v859, %v874
  %v877 = vunpack.c.l.s4 1966171168
  %v878 = vunpack.c.0.s8 %v877
  %v879 = vlaneseq
  %v880 = vshrl.u32 %v879, 7
  %v881 = vsub.s32 %v878, %v880
  %v882 = vrot.slane %v860, %v881
  %v884 = vunpack.c.l.s4 1966171168
  %v885 = vunpack.c.0.s8 %v884
  %v886 = vlaneseq
  %v887 = vshrl.u32 %v886, 7
  %v888 = vsub.s32 %v885, %v887
  %v889 = vrot.slane %v861, %v888
  %v890 = vcombine.low %v868, %v875
  %v891 = vcombine.low %v882, %v889
  %v893 = vunpack.c.l.s4 1966171168
  %v894 = vunpack.c.0.s8 %v893
  %v895 = vlaneseq
  %v896 = vshrl.u32 %v895, 7
  %v897 = vsub.s32 %v894, %v896
  %v898 = vrot.slane %v890, %v897
  %v900 = vunpack.c.l.s4 1966171168
  %v901 = vunpack.c.0.s8 %v900
  %v902 = vlaneseq
  %v903 = vshrl.u32 %v902, 7
  %v904 = vsub.s32 %v901, %v903
  %v905 = vrot.slane %v891, %v904
  %v906 = vcombine.low %v898, %v905
  %v907 = vcombine.low %v198, %v141
  %v908 = vcombine.low %v142, %v143
  %v909 = vcombine.low %v158, %v165
  %v910 = vcombine.low %v166, %v167
  %v912 = vunpack.c.l.s4 1966171168
  %v913 = vunpack.c.0.s8 %v912
  %v914 = vlaneseq
  %v915 = vshrl.u32 %v914, 7
  %v916 = vsub.s32 %v913, %v915
  %v917 = vrot.slane %v907, %v916
  %v919 = vunpack.c.l.s4 1966171168
  %v920 = vunpack.c.0.s8 %v919
  %v921 = vlaneseq
  %v922 = vshrl.u32 %v921, 7
  %v923 = vsub.s32 %v920, %v922
  %v924 = vrot.slane %v908, %v923
  %v926 = vunpack.c.l.s4 1966171168
  %v927 = vunpack.c.0.s8 %v926
  %v928 = vlaneseq
  %v929 = vshrl.u32 %v928, 7
  %v930 = vsub.s32 %v927, %v929
  %v931 = vrot.slane %v909, %v930
  %v933 = vunpack.c.l.s4 1966171168
  %v934 = vunpack.c.0.s8 %v933
  %v935 = vlaneseq
  %v936 = vshrl.u32 %v935, 7
  %v937 = vsub.s32 %v934, %v936
  %v938 = vrot.slane %v910, %v937
  %v939 = vcombine.low %v917, %v924
  %v940 = vcombine.low %v931, %v938
  %v942 = vunpack.c.l.s4 1966171168
  %v943 = vunpack.c.0.s8 %v942
  %v944 = vlaneseq
  %v945 = vshrl.u32 %v944, 7
  %v946 = vsub.s32 %v943, %v945
  %v947 = vrot.slane %v939, %v946
  %v949 = vunpack.c.l.s4 1966171168
  %v950 = vunpack.c.0.s8 %v949
  %v951 = vlaneseq
  %v952 = vshrl.u32 %v951, 7
  %v953 = vsub.s32 %v950, %v952
  %v954 = vrot.slane %v940, %v953
  %v955 = vcombine.low %v947, %v954
  %v956 = vcombine.low %v181, %v206
  %v958 = vunpack.c.l.s4 1966171168
  %v959 = vunpack.c.0.s8 %v958
  %v960 = vlaneseq
  %v961 = vshrl.u32 %v960, 7
  %v962 = vsub.s32 %v959, %v961
  %v963 = vrot.slane %v956, %v962
  %v965 = vunpack.c.l.s4 1966171168
  %v966 = vunpack.c.0.s8 %v965
  %v967 = vlaneseq
  %v968 = vshrl.u32 %v967, 7
  %v969 = vsub.s32 %v966, %v968
  %v970 = vrot.slane %v963, %v969
  %v980 = vunpack.c.l.b16 %v849
  %v981 = vunpack.c.h.b16 %v849
  %v982 = vunpack.c.l.b16 %v850
  %v983 = vunpack.c.h.b16 %v850
  %v984 = vunpack.c.l.b16 %v851
  %v985 = vunpack.c.h.b16 %v851
  %v986 = vunpack.c.l.b16 %v852
  %v987 = vunpack.c.h.b16 %v852
  %v988 = vunpack.c.l.b16 %v853
  %v989 = vunpack.c.h.b16 %v853
  %v990 = vunpack.c.l.b16 %v854
  %v991 = vunpack.c.h.b16 %v854
  %v992 = vunpack.c.l.b16 %v855
  %v993 = vunpack.c.h.b16 %v855
  %v994 = vunpack.c.l.b16 %v856
  %v995 = vunpack.c.h.b16 %v856
  %v996 = vunpack.c.l.b16 %v857
  %v997 = vunpack.c.h.b16 %v857
  %v998 = vpack.c.b16 %v982, %v980
  %v999 = vpack.c.b16 %v983, %v981
  %v1000 = vpack.c.b16 %v986, %v984
  %v1001 = vpack.c.b16 %v987, %v985
  %v1002 = vpack.c.b16 %v990, %v988
  %v1003 = vpack.c.b16 %v991, %v989
  %v1004 = vpack.c.b16 %v994, %v992
  %v1005 = vpack.c.b16 %v995, %v993
  %v1006 = vpack.c.b16 %v996, %v996
  %v1007 = vpack.c.b16 %v997, %v997
  %v1017 = vsel %vm536, %v906, 0
  %v1020 = vsel %vm536, %v955, 0
  %v1023 = vsel %vm536, %v970, 0
  %v1026 = vsel %vm546, %v1006, 0
  %v1029 = vsel %vm546, %v1007, 0
  %1031 = vmatprep.subr.bf16.mxu0 %v999
  %1032 = vmatpush1.bf16.msra.mxu0 %v998
  %1033 = vmatprep.subr.bf16.mxu0 %v1001
  %1034 = vmatpush1.bf16.msra.mxu0 %v1000
  %1035 = vmatprep.subr.bf16.mxu0 %v1003
  %1036 = vmatpush1.bf16.msra.mxu0 %v1002
  %1037 = vmatprep.subr.bf16.mxu0 %v1005
  %1038 = vmatpush1.bf16.msra.mxu0 %v1004
  %1039 = vmatprep.subr.bf16.mxu0 %v1029
  %1040 = vmatpush1.bf16.msra.mxu0 %v1026
  %1041 = vmatprep.subr.bf16.mxu0 0
  %1042 = vmatpush1.bf16.msra.mxu0 0
  %1043 = vmatprep.subr.bf16.mxu0 0
  %1044 = vmatpush1.bf16.msra.mxu0 0
  %1045 = vmatprep.subr.bf16.mxu0 0
  %1046 = vmatpush1.bf16.msra.mxu0 0
  %1047 = vmatprep.subr.bf16.mxu0 0
  %1048 = vmatpush1.bf16.msra.mxu0 0
  %1049 = vmatprep.subr.bf16.mxu0 0
  %1050 = vmatpush1.bf16.msra.mxu0 0
  %1051 = vmatprep.subr.bf16.mxu0 0
  %1052 = vmatpush1.bf16.msra.mxu0 0
  %1053 = vmatprep.subr.bf16.mxu0 0
  %1054 = vmatpush1.bf16.msra.mxu0 0
  %1055 = vmatprep.subr.bf16.mxu0 0
  %1056 = vmatpush1.bf16.msra.mxu0 0
  %1057 = vmatprep.subr.bf16.mxu0 0
  %1058 = vmatpush1.bf16.msra.mxu0 0
  %1059 = vmatprep.subr.bf16.mxu0 0
  %1060 = vmatpush1.bf16.msra.mxu0 0
  %1061 = vmatprep.subr.bf16.mxu0 0
  %1062 = vmatpush1.bf16.msra.mxu0 0
  %1063 = vmatprep.mubr.bf16.mxu0 0
  %1064 = vmatmul.mubr.bf16.gmra.mrb[0].mxu0 %v1017
  %v1065 = vpop.f32.mrb[0].mxu0
  %v1066 = vadd.f32 0.0, %v1065
  %v1067 = vpop.f32.mrb[0].mxu0
  %v1068 = vadd.f32 0.0, %v1067
  %v1069 = vpop.f32.mrb[0].mxu0
  %v1070 = vadd.f32 0.0, %v1069
  %v1071 = vpop.f32.mrb[0].mxu0
  %v1072 = vadd.f32 0.0, %v1071
  %1073 = vmatprep.mubr.bf16.mxu0 0
  %1074 = vmatmul.mubr.bf16.gmra.mrb[0].mxu0 %v1020
  %v1075 = vpop.f32.mrb[0].mxu0
  %v1076 = vadd.f32 0.0, %v1075
  %v1077 = vpop.f32.mrb[0].mxu0
  %v1078 = vadd.f32 0.0, %v1077
  %v1079 = vpop.f32.mrb[0].mxu0
  %v1080 = vadd.f32 0.0, %v1079
  %v1081 = vpop.f32.mrb[0].mxu0
  %v1082 = vadd.f32 0.0, %v1081
  %1083 = vmatprep.mubr.bf16.mxu0 0
  %1084 = vmatmul.mubr.bf16.gmra.mrb[0].mxu0 %v1023
  %v1085 = vpop.f32.mrb[0].mxu0
  %v1086 = vadd.f32 0.0, %v1085
  %v1087 = vpop.f32.mrb[0].mxu0
  %v1088 = vadd.f32 0.0, %v1087
  %v1089 = vpop.f32.mrb[0].mxu0
  %v1090 = vpop.f32.mrb[0].mxu0
  %1091 = vdwg.mxu0
  %v1092 = vadd.f32 %v822, %v1066
  %v1093 = vadd.f32 %v824, %v1068
  %v1094 = vadd.f32 %v826, %v1070
  %v1095 = vadd.f32 %v828, %v1072
  %v1096 = vadd.f32 %v832, %v1076
  %v1097 = vadd.f32 %v834, %v1078
  %v1098 = vadd.f32 %v836, %v1080
  %v1099 = vadd.f32 %v838, %v1082
  %v1100 = vadd.f32 %v842, %v1086
  %v1101 = vadd.f32 %v844, %v1088
  %v1102 = vld [vmem:[%s2] sm:$0x3]
  %v1104 = vlaneseq
  %v1105 = vshrl.u32 %v1104, 7
  %v1106 = vsub.s32 0, %v1105
  %v1107 = vrot.slane %v1102, %v1106
  %v1108 = vlaneseq
  %v1109 = vshrl.u32 %v1108, 7
  %v1110 = vsub.s32 1, %v1109
  %v1111 = vrot.slane %v1102, %v1110
  %v1114 = vadd.f32 %v1092, %v1107
  %v1115 = vadd.f32 %v1093, %v1111
  %v1116 = vadd.f32 %v1094, %v1107
  %v1117 = vadd.f32 %v1095, %v1111
  %v1118 = vadd.f32 %v1096, %v1107
  %v1119 = vadd.f32 %v1097, %v1111
  %v1120 = vadd.f32 %v1098, %v1107
  %v1121 = vadd.f32 %v1099, %v1111
  %v1122 = vadd.f32 %v1100, %v1107
  %v1123 = vadd.f32 %v1101, %v1111
  %v1124 = vmax.f32 %v1114, 0.0
  %v1125 = vmax.f32 %v1115, 0.0
  %v1126 = vmax.f32 %v1116, 0.0
  %v1127 = vmax.f32 %v1117, 0.0
  %v1128 = vmax.f32 %v1118, 0.0
  %v1129 = vmax.f32 %v1119, 0.0
  %v1130 = vmax.f32 %v1120, 0.0
  %v1131 = vmax.f32 %v1121, 0.0
  %v1132 = vmax.f32 %v1122, 0.0
  %v1133 = vmax.f32 %v1123, 0.0
  %v1144 = vcombine.low %v1124, %v1125
  %v1145 = vcombine.high %v1124, %v1125
  %v1147 = vunpack.c.l.s4 1983009808
  %v1148 = vunpack.c.0.s8 %v1147
  %v1149 = vlaneseq
  %v1150 = vshrl.u32 %v1149, 7
  %v1151 = vsub.s32 %v1148, %v1150
  %v1152 = vrot.slane %v1144, %v1151
  %v1154 = vunpack.c.l.s4 1983009808
  %v1155 = vunpack.c.0.s8 %v1154
  %v1156 = vlaneseq
  %v1157 = vshrl.u32 %v1156, 7
  %v1158 = vsub.s32 %v1155, %v1157
  %v1159 = vrot.slane %v1145, %v1158
  %v1160 = vcombine.high %v1152, %v1152
  %v1161 = vcombine.high %v1159, %v1159
  %v1162 = vcombine.low %v1126, %v1127
  %v1163 = vcombine.high %v1126, %v1127
  %v1165 = vunpack.c.l.s4 1983009808
  %v1166 = vunpack.c.0.s8 %v1165
  %v1167 = vlaneseq
  %v1168 = vshrl.u32 %v1167, 7
  %v1169 = vsub.s32 %v1166, %v1168
  %v1170 = vrot.slane %v1162, %v1169
  %v1172 = vunpack.c.l.s4 1983009808
  %v1173 = vunpack.c.0.s8 %v1172
  %v1174 = vlaneseq
  %v1175 = vshrl.u32 %v1174, 7
  %v1176 = vsub.s32 %v1173, %v1175
  %v1177 = vrot.slane %v1163, %v1176
  %v1178 = vcombine.high %v1170, %v1170
  %v1179 = vcombine.high %v1177, %v1177
  %v1180 = vcombine.low %v1128, %v1129
  %v1181 = vcombine.high %v1128, %v1129
  %v1183 = vunpack.c.l.s4 1983009808
  %v1184 = vunpack.c.0.s8 %v1183
  %v1185 = vlaneseq
  %v1186 = vshrl.u32 %v1185, 7
  %v1187 = vsub.s32 %v1184, %v1186
  %v1188 = vrot.slane %v1180, %v1187
  %v1190 = vunpack.c.l.s4 1983009808
  %v1191 = vunpack.c.0.s8 %v1190
  %v1192 = vlaneseq
  %v1193 = vshrl.u32 %v1192, 7
  %v1194 = vsub.s32 %v1191, %v1193
  %v1195 = vrot.slane %v1181, %v1194
  %v1196 = vcombine.high %v1188, %v1188
  %v1197 = vcombine.high %v1195, %v1195
  %v1198 = vcombine.low %v1130, %v1131
  %v1199 = vcombine.high %v1130, %v1131
  %v1201 = vunpack.c.l.s4 1983009808
  %v1202 = vunpack.c.0.s8 %v1201
  %v1203 = vlaneseq
  %v1204 = vshrl.u32 %v1203, 7
  %v1205 = vsub.s32 %v1202, %v1204
  %v1206 = vrot.slane %v1198, %v1205
  %v1208 = vunpack.c.l.s4 1983009808
  %v1209 = vunpack.c.0.s8 %v1208
  %v1210 = vlaneseq
  %v1211 = vshrl.u32 %v1210, 7
  %v1212 = vsub.s32 %v1209, %v1211
  %v1213 = vrot.slane %v1199, %v1212
  %v1214 = vcombine.high %v1206, %v1206
  %v1215 = vcombine.high %v1213, %v1213
  %v1216 = vcombine.low %v1132, %v1133
  %v1218 = vunpack.c.l.s4 1983009808
  %v1219 = vunpack.c.0.s8 %v1218
  %v1220 = vlaneseq
  %v1221 = vshrl.u32 %v1220, 7
  %v1222 = vsub.s32 %v1219, %v1221
  %v1223 = vrot.slane %v1216, %v1222
  %v1224 = vcombine.high %v1223, %v1223
  %s1225 = smul.u32 0, 16
  %v1226 = vlaneseq
  %v1227 = vshrl.u32 %v1226, 7
  %v1228 = vadd.s32 %v1227, 8
  %v1229 = vadd.s32 %v1227, 16
  %s1230 = ssub.s32 %s1225, 1
  %v1231 = vstv %s1230
  %v1232 = vadd.s32 %v1231, %v1227
  %v1233 = vadd.s32 %v1231, %v1228
  %v1234 = vadd.s32 %v1231, %v1229
  %vm1235 = vcmp.ge.s32.totalorder %v1232, 0
  %vm1236 = vcmp.ge.s32.totalorder %v1233, 0
  %vm1237 = vcmp.ge.s32.totalorder %v1234, 0
  %vm1238 = vcmp.lt.s32.totalorder %v1232, 16
  %vm1239 = vcmp.lt.s32.totalorder %v1233, 16
  %vm1240 = vcmp.lt.s32.totalorder %v1234, 16
  %vm1241 = vmand %vm1235, %vm1238
  %vm1242 = vmand %vm1236, %vm1239
  %vm1243 = vmand %vm1237, %vm1240
  %v1244 = vsel %vm1241, 1, 0
  %v1245 = vsel %vm1242, 1, 0
  %v1246 = vsel %vm1243, 1, 0
  %vm1247 = vcmp.eq.s32.totalorder %v1244, 1
  %vm1248 = vcmp.eq.s32.totalorder %v1245, 1
  %vm1249 = vcmp.eq.s32.totalorder %v1246, 1
  %v1250 = vcombine.low %v1152, %v1160
  %v1251 = vcombine.low %v1159, %v1161
  %v1253 = vunpack.c.l.s4 1983009808
  %v1254 = vunpack.c.0.s8 %v1253
  %v1255 = vlaneseq
  %v1256 = vshrl.u32 %v1255, 7
  %v1257 = vsub.s32 %v1254, %v1256
  %v1258 = vrot.slane %v1250, %v1257
  %v1260 = vunpack.c.l.s4 1983009808
  %v1261 = vunpack.c.0.s8 %v1260
  %v1262 = vlaneseq
  %v1263 = vshrl.u32 %v1262, 7
  %v1264 = vsub.s32 %v1261, %v1263
  %v1265 = vrot.slane %v1251, %v1264
  %v1266 = vcombine.low %v1258, %v1265
  %v1267 = vcombine.high %v1258, %v1265
  %v1268 = vcombine.low %v1170, %v1178
  %v1269 = vcombine.low %v1177, %v1179
  %v1271 = vunpack.c.l.s4 1983009808
  %v1272 = vunpack.c.0.s8 %v1271
  %v1273 = vlaneseq
  %v1274 = vshrl.u32 %v1273, 7
  %v1275 = vsub.s32 %v1272, %v1274
  %v1276 = vrot.slane %v1268, %v1275
  %v1278 = vunpack.c.l.s4 1983009808
  %v1279 = vunpack.c.0.s8 %v1278
  %v1280 = vlaneseq
  %v1281 = vshrl.u32 %v1280, 7
  %v1282 = vsub.s32 %v1279, %v1281
  %v1283 = vrot.slane %v1269, %v1282
  %v1284 = vcombine.low %v1276, %v1283
  %v1285 = vcombine.high %v1276, %v1283
  %v1287 = vunpack.c.l.s4 1983009808
  %v1288 = vunpack.c.0.s8 %v1287
  %v1289 = vlaneseq
  %v1290 = vshrl.u32 %v1289, 7
  %v1291 = vsub.s32 %v1288, %v1290
  %v1292 = vrot.slane %v1188, %v1291
  %v1293 = vcombine.high %v1292, %v1292
  %v1294 = vcombine.low %v1196, %v1195
  %v1295 = vcombine.low %v1197, %v1206
  %v1297 = vunpack.c.l.s4 1983009808
  %v1298 = vunpack.c.0.s8 %v1297
  %v1299 = vlaneseq
  %v1300 = vshrl.u32 %v1299, 7
  %v1301 = vsub.s32 %v1298, %v1300
  %v1302 = vrot.slane %v1294, %v1301
  %v1304 = vunpack.c.l.s4 1983009808
  %v1305 = vunpack.c.0.s8 %v1304
  %v1306 = vlaneseq
  %v1307 = vshrl.u32 %v1306, 7
  %v1308 = vsub.s32 %v1305, %v1307
  %v1309 = vrot.slane %v1295, %v1308
  %v1310 = vcombine.low %v1302, %v1309
  %v1311 = vcombine.high %v1302, %v1309
  %v1312 = vcombine.low %v1214, %v1213
  %v1313 = vcombine.low %v1215, %v1223
  %v1315 = vunpack.c.l.s4 1983009808
  %v1316 = vunpack.c.0.s8 %v1315
  %v1317 = vlaneseq
  %v1318 = vshrl.u32 %v1317, 7
  %v1319 = vsub.s32 %v1316, %v1318
  %v1320 = vrot.slane %v1312, %v1319
  %v1322 = vunpack.c.l.s4 1983009808
  %v1323 = vunpack.c.0.s8 %v1322
  %v1324 = vlaneseq
  %v1325 = vshrl.u32 %v1324, 7
  %v1326 = vsub.s32 %v1323, %v1325
  %v1327 = vrot.slane %v1313, %v1326
  %v1328 = vcombine.low %v1320, %v1327
  %v1329 = vcombine.high %v1320, %v1327
  %v1331 = vunpack.c.l.s4 1983009808
  %v1332 = vunpack.c.0.s8 %v1331
  %v1333 = vlaneseq
  %v1334 = vshrl.u32 %v1333, 7
  %v1335 = vsub.s32 %v1332, %v1334
  %v1336 = vrot.slane %v1224, %v1335
  %v1337 = vcombine.high %v1336, %v1336
  %v1350 = vsel %vm1247, %v1266, 0.0
  %v1351 = vsel %vm1247, %v1267, 0.0
  %v1352 = vsel %vm1248, %v1284, 0.0
  %v1353 = vsel %vm1248, %v1285, 0.0
  %v1354 = vsel %vm1249, %v1292, 0.0
  %v1355 = vsel %vm1249, %v1293, 0.0
  %v1356 = vsel %vm1247, %v1310, 0.0
  %v1357 = vsel %vm1247, %v1311, 0.0
  %v1358 = vsel %vm1248, %v1328, 0.0
  %v1359 = vsel %vm1248, %v1329, 0.0
  %v1360 = vsel %vm1249, %v1336, 0.0
  %v1361 = vsel %vm1249, %v1337, 0.0
  %v1362 = vpack.c.bf16 %v1352, %v1350
  %v1363 = vpack.c.bf16 %v1353, %v1351
  %v1364 = vpack.c.bf16 %v1354, %v1354
  %v1365 = vpack.c.bf16 %v1355, %v1355
  %v1366 = vpack.c.bf16 %v1358, %v1356
  %v1367 = vpack.c.bf16 %v1359, %v1357
  %v1368 = vpack.c.bf16 %v1360, %v1360
  %v1369 = vpack.c.bf16 %v1361, %v1361
  %v1370 = vld [vmem:[%s3] sm:$0xf]
  %v1371 = vld [vmem:[%s3 + $0x4] sm:$0xf]
  %v1372 = vld [vmem:[%s3 + $0x8] sm:$0xf]
  %v1373 = vld [vmem:[%s3 + $0xc] sm:$0xf]
  %v1374 = vld [vmem:[%s3 + $0x10] sm:$0xf]
  %v1375 = vld [vmem:[%s3 + $0x14] sm:$0xf]
  %v1376 = vld [vmem:[%s3 + $0x18] sm:$0xf]
  %v1377 = vld [vmem:[%s3 + $0x1c] sm:$0xf]
  %v1378 = vld [vmem:[%s3 + $0x20] sm:$0xf]
  %v1379 = vld [vmem:[%s3 + $0x24] sm:$0xf]
  %v1380 = vld [vmem:[%s3 + $0x28] sm:$0xf]
  %v1381 = vld [vmem:[%s3 + $0x2c] sm:$0xf]
  %v1382 = vld [vmem:[%s3 + $0x30] sm:$0xf]
  %v1383 = vld [vmem:[%s3 + $0x34] sm:$0xf]
  %v1384 = vld [vmem:[%s3 + $0x38] sm:$0xf]
  %v1385 = vld [vmem:[%s3 + $0x3c] sm:$0xf]
  %v1386 = vld [vmem:[%s3 + $0x40] sm:$0xf]
  %v1387 = vld [vmem:[%s3 + $0x44] sm:$0xf]
  %vm1388 = vsmask.f32 7424
  %v1390 = vshrl.u32 %v1362, 16
  %v1392 = vshll.u32 %v1362, 16
  %v1394 = vrot.slane %v1392, 1
  %v1395 = vor.u32 %v1390, %v1394
  %v1397 = vshll.u32 %v1364, 16
  %v1399 = vrot.slane %v1397, 1
  %v1400 = vsel %vm1388, %v1395, %v1399
  %v1402 = vshrl.u32 %v1363, 16
  %v1404 = vshll.u32 %v1363, 16
  %v1406 = vrot.slane %v1404, 1
  %v1407 = vor.u32 %v1402, %v1406
  %v1409 = vshll.u32 %v1365, 16
  %v1411 = vrot.slane %v1409, 1
  %v1412 = vsel %vm1388, %v1407, %v1411
  %v1414 = vshrl.u32 %v1366, 16
  %v1416 = vshll.u32 %v1366, 16
  %v1418 = vrot.slane %v1416, 1
  %v1419 = vor.u32 %v1414, %v1418
  %v1421 = vshll.u32 %v1368, 16
  %v1423 = vrot.slane %v1421, 1
  %v1424 = vsel %vm1388, %v1419, %v1423
  %v1426 = vshrl.u32 %v1367, 16
  %v1428 = vshll.u32 %v1367, 16
  %v1430 = vrot.slane %v1428, 1
  %v1431 = vor.u32 %v1426, %v1430
  %v1433 = vshll.u32 %v1369, 16
  %v1435 = vrot.slane %v1433, 1
  %v1436 = vsel %vm1388, %v1431, %v1435
  %s1439 = scalar_lea.vmem %s3, 72
  %v1440 = vld [vmem:[%s1439] sm:$0xf]
  %v1441 = vld [vmem:[%s1439 + $0x4] sm:$0xf]
  %v1442 = vld [vmem:[%s1439 + $0x8] sm:$0xf]
  %v1443 = vld [vmem:[%s1439 + $0xc] sm:$0xf]
  %v1444 = vld [vmem:[%s1439 + $0x10] sm:$0xf]
  %v1445 = vld [vmem:[%s1439 + $0x14] sm:$0xf]
  %v1446 = vld [vmem:[%s1439 + $0x18] sm:$0xf]
  %v1447 = vld [vmem:[%s1439 + $0x1c] sm:$0xf]
  %v1448 = vld [vmem:[%s1439 + $0x20] sm:$0xf]
  %v1449 = vld [vmem:[%s1439 + $0x24] sm:$0xf]
  %v1450 = vld [vmem:[%s1439 + $0x28] sm:$0xf]
  %v1451 = vld [vmem:[%s1439 + $0x2c] sm:$0xf]
  %v1452 = vld [vmem:[%s1439 + $0x30] sm:$0xf]
  %v1453 = vld [vmem:[%s1439 + $0x34] sm:$0xf]
  %v1454 = vld [vmem:[%s1439 + $0x38] sm:$0xf]
  %v1455 = vld [vmem:[%s1439 + $0x3c] sm:$0xf]
  %v1456 = vld [vmem:[%s1439 + $0x40] sm:$0xf]
  %v1457 = vld [vmem:[%s1439 + $0x44] sm:$0xf]
  %v1476 = vunpack.c.l.b16 %v1440
  %v1477 = vunpack.c.l.b16 %v1441
  %v1478 = vunpack.c.l.b16 %v1442
  %v1479 = vunpack.c.l.b16 %v1443
  %v1480 = vunpack.c.l.b16 %v1444
  %v1481 = vunpack.c.l.b16 %v1445
  %v1482 = vunpack.c.l.b16 %v1446
  %v1483 = vunpack.c.l.b16 %v1447
  %v1484 = vunpack.c.l.b16 %v1448
  %v1485 = vunpack.c.l.b16 %v1449
  %v1486 = vunpack.c.l.b16 %v1450
  %v1487 = vunpack.c.l.b16 %v1451
  %v1488 = vunpack.c.l.b16 %v1452
  %v1489 = vunpack.c.l.b16 %v1453
  %v1490 = vunpack.c.l.b16 %v1454
  %v1491 = vunpack.c.l.b16 %v1455
  %v1492 = vunpack.c.l.b16 %v1456
  %v1493 = vunpack.c.l.b16 %v1457
  %v1494 = vpack.c.b16 %v1477, %v1476
  %v1495 = vpack.c.b16 %v1479, %v1478
  %v1496 = vpack.c.b16 %v1481, %v1480
  %v1497 = vpack.c.b16 %v1483, %v1482
  %v1498 = vpack.c.b16 %v1485, %v1484
  %v1499 = vpack.c.b16 %v1487, %v1486
  %v1500 = vpack.c.b16 %v1489, %v1488
  %v1501 = vpack.c.b16 %v1491, %v1490
  %v1502 = vpack.c.b16 %v1493, %v1492
  %vm1512 = vcmask 130048
  %v1514 = vsel %vm1512, %v1412, 0
  %v1517 = vsel %vm1512, %v1436, 0
  %1519 = vmatprep.subr.bf16.mxu0 0
  %1520 = vmatpush1.bf16.msra.mxu0 %v1494
  %1521 = vmatprep.subr.bf16.mxu0 0
  %1522 = vmatpush1.bf16.msra.mxu0 %v1495
  %1523 = vmatprep.subr.bf16.mxu0 0
  %1524 = vmatpush1.bf16.msra.mxu0 %v1496
  %1525 = vmatprep.subr.bf16.mxu0 0
  %1526 = vmatpush1.bf16.msra.mxu0 %v1497
  %1527 = vmatprep.subr.bf16.mxu0 0
  %1528 = vmatpush1.bf16.msra.mxu0 %v1498
  %1529 = vmatprep.subr.bf16.mxu0 0
  %1530 = vmatpush1.bf16.msra.mxu0 %v1499
  %1531 = vmatprep.subr.bf16.mxu0 0
  %1532 = vmatpush1.bf16.msra.mxu0 %v1500
  %1533 = vmatprep.subr.bf16.mxu0 0
  %1534 = vmatpush1.bf16.msra.mxu0 %v1501
  %1535 = vmatprep.subr.bf16.mxu0 0
  %1536 = vmatpush1.bf16.msra.mxu0 %v1502
  %1537 = vmatprep.subr.bf16.mxu0 0
  %1538 = vmatpush1.bf16.msra.mxu0 0
  %1539 = vmatprep.subr.bf16.mxu0 0
  %1540 = vmatpush1.bf16.msra.mxu0 0
  %1541 = vmatprep.subr.bf16.mxu0 0
  %1542 = vmatpush1.bf16.msra.mxu0 0
  %1543 = vmatprep.subr.bf16.mxu0 0
  %1544 = vmatpush1.bf16.msra.mxu0 0
  %1545 = vmatprep.subr.bf16.mxu0 0
  %1546 = vmatpush1.bf16.msra.mxu0 0
  %1547 = vmatprep.subr.bf16.mxu0 0
  %1548 = vmatpush1.bf16.msra.mxu0 0
  %1549 = vmatprep.subr.bf16.mxu0 0
  %1550 = vmatpush1.bf16.msra.mxu0 0
  %1551 = vmatprep.mubr.bf16.mxu0 %v1514
  %1552 = vmatmul.mubr.bf16.gmra.mrb[0].mxu0 %v1400
  %v1553 = vpop.f32.mrb[0].mxu0
  %v1554 = vadd.f32 0.0, %v1553
  %v1555 = vpop.f32.mrb[0].mxu0
  %v1556 = vpop.f32.mrb[0].mxu0
  %v1557 = vadd.f32 0.0, %v1556
  %v1558 = vpop.f32.mrb[0].mxu0
  %1559 = vmatprep.mubr.bf16.mxu0 %v1517
  %1560 = vmatmul.mubr.bf16.gmra.mrb[0].mxu0 %v1424
  %v1561 = vpop.f32.mrb[0].mxu0
  %v1562 = vadd.f32 0.0, %v1561
  %v1563 = vpop.f32.mrb[0].mxu0
  %v1564 = vpop.f32.mrb[0].mxu0
  %v1565 = vadd.f32 0.0, %v1564
  %v1566 = vpop.f32.mrb[0].mxu0
  %1567 = vdwg.mxu0
  %v1586 = vunpack.c.l.b16 %v1370
  %v1587 = vunpack.c.l.b16 %v1371
  %v1588 = vunpack.c.l.b16 %v1372
  %v1589 = vunpack.c.l.b16 %v1373
  %v1590 = vunpack.c.l.b16 %v1374
  %v1591 = vunpack.c.l.b16 %v1375
  %v1592 = vunpack.c.l.b16 %v1376
  %v1593 = vunpack.c.l.b16 %v1377
  %v1594 = vunpack.c.l.b16 %v1378
  %v1595 = vunpack.c.l.b16 %v1379
  %v1596 = vunpack.c.l.b16 %v1380
  %v1597 = vunpack.c.l.b16 %v1381
  %v1598 = vunpack.c.l.b16 %v1382
  %v1599 = vunpack.c.l.b16 %v1383
  %v1600 = vunpack.c.l.b16 %v1384
  %v1601 = vunpack.c.l.b16 %v1385
  %v1602 = vunpack.c.l.b16 %v1386
  %v1603 = vunpack.c.l.b16 %v1387
  %v1604 = vpack.c.b16 %v1587, %v1586
  %v1605 = vpack.c.b16 %v1589, %v1588
  %v1606 = vpack.c.b16 %v1591, %v1590
  %v1607 = vpack.c.b16 %v1593, %v1592
  %v1608 = vpack.c.b16 %v1595, %v1594
  %v1609 = vpack.c.b16 %v1597, %v1596
  %v1610 = vpack.c.b16 %v1599, %v1598
  %v1611 = vpack.c.b16 %v1601, %v1600
  %v1612 = vpack.c.b16 %v1603, %v1602
  %v1622 = vsel %vm1512, %v1363, 0
  %v1624 = vsel %vm1512, %v1367, 0
  %1626 = vmatprep.subr.bf16.mxu0 0
  %1627 = vmatpush1.bf16.msra.mxu0 %v1604
  %1628 = vmatprep.subr.bf16.mxu0 0
  %1629 = vmatpush1.bf16.msra.mxu0 %v1605
  %1630 = vmatprep.subr.bf16.mxu0 0
  %1631 = vmatpush1.bf16.msra.mxu0 %v1606
  %1632 = vmatprep.subr.bf16.mxu0 0
  %1633 = vmatpush1.bf16.msra.mxu0 %v1607
  %1634 = vmatprep.subr.bf16.mxu0 0
  %1635 = vmatpush1.bf16.msra.mxu0 %v1608
  %1636 = vmatprep.subr.bf16.mxu0 0
  %1637 = vmatpush1.bf16.msra.mxu0 %v1609
  %1638 = vmatprep.subr.bf16.mxu0 0
  %1639 = vmatpush1.bf16.msra.mxu0 %v1610
  %1640 = vmatprep.subr.bf16.mxu0 0
  %1641 = vmatpush1.bf16.msra.mxu0 %v1611
  %1642 = vmatprep.subr.bf16.mxu0 0
  %1643 = vmatpush1.bf16.msra.mxu0 %v1612
  %1644 = vmatprep.subr.bf16.mxu0 0
  %1645 = vmatpush1.bf16.msra.mxu0 0
  %1646 = vmatprep.subr.bf16.mxu0 0
  %1647 = vmatpush1.bf16.msra.mxu0 0
  %1648 = vmatprep.subr.bf16.mxu0 0
  %1649 = vmatpush1.bf16.msra.mxu0 0
  %1650 = vmatprep.subr.bf16.mxu0 0
  %1651 = vmatpush1.bf16.msra.mxu0 0
  %1652 = vmatprep.subr.bf16.mxu0 0
  %1653 = vmatpush1.bf16.msra.mxu0 0
  %1654 = vmatprep.subr.bf16.mxu0 0
  %1655 = vmatpush1.bf16.msra.mxu0 0
  %1656 = vmatprep.subr.bf16.mxu0 0
  %1657 = vmatpush1.bf16.msra.mxu0 0
  %1658 = vmatprep.mubr.bf16.mxu0 %v1622
  %1659 = vmatmul.mubr.bf16.gmra.mrb[0].mxu0 %v1362
  %v1660 = vpop.f32.mrb[0].mxu0
  %v1661 = vadd.f32 %v1554, %v1660
  %v1662 = vpop.f32.mrb[0].mxu0
  %v1663 = vpop.f32.mrb[0].mxu0
  %v1664 = vadd.f32 %v1557, %v1663
  %v1665 = vpop.f32.mrb[0].mxu0
  %1666 = vmatprep.mubr.bf16.mxu0 %v1624
  %1667 = vmatmul.mubr.bf16.gmra.mrb[0].mxu0 %v1366
  %v1668 = vpop.f32.mrb[0].mxu0
  %v1669 = vadd.f32 %v1562, %v1668
  %v1670 = vpop.f32.mrb[0].mxu0
  %v1671 = vpop.f32.mrb[0].mxu0
  %v1672 = vadd.f32 %v1565, %v1671
  %v1673 = vpop.f32.mrb[0].mxu0
  %1674 = vdwg.mxu0
  %vm1683 = vcmask 1046528
  %v1684 = vrot.slane %v1362, 1
  %v1685 = vrot.slane %v1364, 1
  %v1686 = vsel %vm1683, %v1684, %v1685
  %v1687 = vrot.slane %v1363, 1
  %v1688 = vrot.slane %v1365, 1
  %v1689 = vsel %vm1683, %v1687, %v1688
  %v1690 = vrot.slane %v1366, 1
  %v1691 = vrot.slane %v1368, 1
  %v1692 = vsel %vm1683, %v1690, %v1691
  %v1693 = vrot.slane %v1367, 1
  %v1694 = vrot.slane %v1369, 1
  %v1695 = vsel %vm1683, %v1693, %v1694
  %s1698 = scalar_lea.vmem %s3, 144
  %v1699 = vld [vmem:[%s1698] sm:$0xf]
  %v1700 = vld [vmem:[%s1698 + $0x4] sm:$0xf]
  %v1701 = vld [vmem:[%s1698 + $0x8] sm:$0xf]
  %v1702 = vld [vmem:[%s1698 + $0xc] sm:$0xf]
  %v1703 = vld [vmem:[%s1698 + $0x10] sm:$0xf]
  %v1704 = vld [vmem:[%s1698 + $0x14] sm:$0xf]
  %v1705 = vld [vmem:[%s1698 + $0x18] sm:$0xf]
  %v1706 = vld [vmem:[%s1698 + $0x1c] sm:$0xf]
  %v1707 = vld [vmem:[%s1698 + $0x20] sm:$0xf]
  %v1708 = vld [vmem:[%s1698 + $0x24] sm:$0xf]
  %v1709 = vld [vmem:[%s1698 + $0x28] sm:$0xf]
  %v1710 = vld [vmem:[%s1698 + $0x2c] sm:$0xf]
  %v1711 = vld [vmem:[%s1698 + $0x30] sm:$0xf]
  %v1712 = vld [vmem:[%s1698 + $0x34] sm:$0xf]
  %v1713 = vld [vmem:[%s1698 + $0x38] sm:$0xf]
  %v1714 = vld [vmem:[%s1698 + $0x3c] sm:$0xf]
  %v1715 = vld [vmem:[%s1698 + $0x40] sm:$0xf]
  %v1716 = vld [vmem:[%s1698 + $0x44] sm:$0xf]
  %v1735 = vunpack.c.l.b16 %v1699
  %v1736 = vunpack.c.l.b16 %v1700
  %v1737 = vunpack.c.l.b16 %v1701
  %v1738 = vunpack.c.l.b16 %v1702
  %v1739 = vunpack.c.l.b16 %v1703
  %v1740 = vunpack.c.l.b16 %v1704
  %v1741 = vunpack.c.l.b16 %v1705
  %v1742 = vunpack.c.l.b16 %v1706
  %v1743 = vunpack.c.l.b16 %v1707
  %v1744 = vunpack.c.l.b16 %v1708
  %v1745 = vunpack.c.l.b16 %v1709
  %v1746 = vunpack.c.l.b16 %v1710
  %v1747 = vunpack.c.l.b16 %v1711
  %v1748 = vunpack.c.l.b16 %v1712
  %v1749 = vunpack.c.l.b16 %v1713
  %v1750 = vunpack.c.l.b16 %v1714
  %v1751 = vunpack.c.l.b16 %v1715
  %v1752 = vunpack.c.l.b16 %v1716
  %v1753 = vpack.c.b16 %v1736, %v1735
  %v1754 = vpack.c.b16 %v1738, %v1737
  %v1755 = vpack.c.b16 %v1740, %v1739
  %v1756 = vpack.c.b16 %v1742, %v1741
  %v1757 = vpack.c.b16 %v1744, %v1743
  %v1758 = vpack.c.b16 %v1746, %v1745
  %v1759 = vpack.c.b16 %v1748, %v1747
  %v1760 = vpack.c.b16 %v1750, %v1749
  %v1761 = vpack.c.b16 %v1752, %v1751
  %v1772 = vsel %vm1512, %v1689, 0
  %v1775 = vsel %vm1512, %v1695, 0
  %1777 = vmatprep.subr.bf16.mxu0 0
  %1778 = vmatpush1.bf16.msra.mxu0 %v1753
  %1779 = vmatprep.subr.bf16.mxu0 0
  %1780 = vmatpush1.bf16.msra.mxu0 %v1754
  %1781 = vmatprep.subr.bf16.mxu0 0
  %1782 = vmatpush1.bf16.msra.mxu0 %v1755
  %1783 = vmatprep.subr.bf16.mxu0 0
  %1784 = vmatpush1.bf16.msra.mxu0 %v1756
  %1785 = vmatprep.subr.bf16.mxu0 0
  %1786 = vmatpush1.bf16.msra.mxu0 %v1757
  %1787 = vmatprep.subr.bf16.mxu0 0
  %1788 = vmatpush1.bf16.msra.mxu0 %v1758
  %1789 = vmatprep.subr.bf16.mxu0 0
  %1790 = vmatpush1.bf16.msra.mxu0 %v1759
  %1791 = vmatprep.subr.bf16.mxu0 0
  %1792 = vmatpush1.bf16.msra.mxu0 %v1760
  %1793 = vmatprep.subr.bf16.mxu0 0
  %1794 = vmatpush1.bf16.msra.mxu0 %v1761
  %1795 = vmatprep.subr.bf16.mxu0 0
  %1796 = vmatpush1.bf16.msra.mxu0 0
  %1797 = vmatprep.subr.bf16.mxu0 0
  %1798 = vmatpush1.bf16.msra.mxu0 0
  %1799 = vmatprep.subr.bf16.mxu0 0
  %1800 = vmatpush1.bf16.msra.mxu0 0
  %1801 = vmatprep.subr.bf16.mxu0 0
  %1802 = vmatpush1.bf16.msra.mxu0 0
  %1803 = vmatprep.subr.bf16.mxu0 0
  %1804 = vmatpush1.bf16.msra.mxu0 0
  %1805 = vmatprep.subr.bf16.mxu0 0
  %1806 = vmatpush1.bf16.msra.mxu0 0
  %1807 = vmatprep.subr.bf16.mxu0 0
  %1808 = vmatpush1.bf16.msra.mxu0 0
  %1809 = vmatprep.mubr.bf16.mxu0 %v1772
  %1810 = vmatmul.mubr.bf16.gmra.mrb[0].mxu0 %v1686
  %v1811 = vpop.f32.mrb[0].mxu0
  %v1812 = vadd.f32 0.0, %v1811
  %v1813 = vpop.f32.mrb[0].mxu0
  %v1814 = vpop.f32.mrb[0].mxu0
  %v1815 = vadd.f32 0.0, %v1814
  %v1816 = vpop.f32.mrb[0].mxu0
  %1817 = vmatprep.mubr.bf16.mxu0 %v1775
  %1818 = vmatmul.mubr.bf16.gmra.mrb[0].mxu0 %v1692
  %v1819 = vpop.f32.mrb[0].mxu0
  %v1820 = vadd.f32 0.0, %v1819
  %v1821 = vpop.f32.mrb[0].mxu0
  %v1822 = vpop.f32.mrb[0].mxu0
  %v1823 = vadd.f32 0.0, %v1822
  %v1824 = vpop.f32.mrb[0].mxu0
  %1825 = vdwg.mxu0
  %v1826 = vadd.f32 %v1661, %v1812
  %v1827 = vadd.f32 %v1664, %v1815
  %v1828 = vadd.f32 %v1669, %v1820
  %v1829 = vadd.f32 %v1672, %v1823
  %v1830 = vld [vmem:[%s4] sm:$0x1]
  %v1832 = vlaneseq
  %v1833 = vshrl.u32 %v1832, 7
  %v1834 = vsub.s32 0, %v1833
  %v1835 = vrot.slane %v1830, %v1834
  %v1837 = vadd.f32 %v1826, %v1835
  %v1838 = vadd.f32 %v1827, %v1835
  %v1839 = vadd.f32 %v1828, %v1835
  %v1840 = vadd.f32 %v1829, %v1835
  %v1841 = vmax.f32 %v1837, 0.0
  %v1842 = vmax.f32 %v1838, 0.0
  %v1843 = vmax.f32 %v1839, 0.0
  %v1844 = vmax.f32 %v1840, 0.0
  %1845 = vst [vmem:[%s5] sm:$0xff] %v1841
  %1846 = vst [vmem:[%s5 + $0x8] sm:$0xff] %v1842
  %1847 = vst [vmem:[%s5 + $0x10] sm:$0xff] %v1843
  %1848 = vst [vmem:[%s5 + $0x18] sm:$0xff] %v1844
  // Predicated region
  $region22: #{_conv_block_impl.1} parent=0 // pred_check
    _
  $region23: #{_conv_block_impl.1} parent=0 // pred_check_branch
    %1850 = sbr.rel (0) target = $region25
  $region24: #{_conv_block_impl.1} parent=0 // pred_region
    _
  $region25: #{_conv_block_impl.1} parent=0 // pred_fallthru
    _
  // Predicated region
  $region26: #{_conv_block_impl.1} parent=0 // pred_check
    _
  $region27: #{_conv_block_impl.1} parent=0 // pred_check_branch
    %1852 = sbr.rel (0) target = $region29
  $region28: #{_conv_block_impl.1} parent=0 // pred_region
    _
  $region29: #{_conv_block_impl.1} parent=0 // pred_fallthru
    _

</llo_original>
